<compile_context>
chip_gen: v5e
topology: v5e:2x2
jax: 0.10.0
libtpu: 0.0.40
codegen_flags: <defaults>
</compile_context>

<pallas_src>
import jax
import jax.numpy as jnp
from jax import lax
from jax.experimental import pallas as pl
from jax.experimental.pallas import tpu as pltpu

L = 2                 # layer_n
LANE = 128
MAX_B_TILE = 256      # MXU height on v6e/v7x
MATMUL_DTYPE = jnp.bfloat16


def _round_up(n, m):
    return ((n + m - 1) // m) * m


def rnn_kernel(x_ref, len_ref, hinit_ref,
               wih0_ref, whh0_ref, b0_ref,
               w1_ref, b1_ref,
               z_ref, xproj_ref, cat_ref):
    # x_ref:      (T, Bt, D)     time-major, batch-padded input tile (bf16, D unpadded)
    # len_ref:    (Bt, 1)        int32 valid lengths
    # hinit_ref:  (L, 1, Hp)     learned initial hidden, zero-padded along H (f32)
    # wih0_ref:   (D, Hp)        W_ih.T layer 0 (bf16)
    # whh0_ref:   (Hp, Hp)       W_hh.T layer 0 (bf16)
    # b0_ref:     (1, Hp)        b_ih + b_hh layer 0 (f32)
    # w1_ref:     (2*Hp, Hp)     [W_ih1.T ; W_hh1.T] stacked (bf16, fused layer-1 matmul)
    # b1_ref:     (1, Hp)        b_ih + b_hh layer 1 (f32)
    # z_ref:      (Bt, 2*Hp)     output: [layer-0 hidden | layer-1 hidden] (f32)
    # xproj_ref:  (T*Bt, Hp)     VMEM scratch: precomputed x_t @ Wih0 + b0 (f32)
    # cat_ref:    (Bt, 2*Hp)     VMEM carry buffer: bf16 [h0 | h1] for the fused layer-1 dot
    T, Bt, D = x_ref.shape
    Hp = whh0_ref.shape[0]

    # --- hoisted layer-0 input projection: independent of the recurrence, bias folded in.
    if T * Bt <= 1024:
        # small tile: one well-shaped MXU call over all T steps
        x2d = x_ref[...].reshape(T * Bt, D)
        xproj_ref[...] = (jnp.dot(x2d, wih0_ref[...],
                                  preferred_element_type=jnp.float32)
                          + b0_ref[...])
    else:
        # large tile: stream per-t stores so the whole x tile never lives in vregs
        w_ih0 = wih0_ref[...]
        b0b = jnp.broadcast_to(b0_ref[...], (Bt, Hp))

        @pl.loop(0, T)
        def _(t):
            off = pl.multiple_of(t * Bt, Bt)
            xproj_ref[pl.ds(off, Bt), :] = (
                jnp.dot(x_ref[t], w_ih0, preferred_element_type=jnp.float32) + b0b)

    # --- loop-invariant values (hoisted once)
    lens = len_ref[...]                                    # (Bt, 1) int32
    whh0 = whh0_ref[...]                                   # (Hp, Hp) bf16
    w1 = w1_ref[...]                                       # (2*Hp, Hp) bf16
    b1 = jnp.broadcast_to(b1_ref[...], (Bt, Hp))           # broadcast hoisted (f32)

    # f32 recurrent carries (exact pack_padded freeze semantics)
    h0 = jnp.broadcast_to(hinit_ref[0], (Bt, Hp)).astype(jnp.float32)
    h1 = jnp.broadcast_to(hinit_ref[1], (Bt, Hp)).astype(jnp.float32)
    # persistent carry buffer replaces per-step concatenate: lane-aligned half-stores
    cat_ref[:, Hp:] = h1.astype(cat_ref.dtype)

    def step(t, h0, h1, off):
        valid = lens > t                                   # (Bt, 1) freeze mask
        u0 = xproj_ref[pl.ds(off, Bt), :]                  # precomputed x_t @ Wih0 + b0
        n0 = jnp.tanh(u0 + jnp.dot(h0.astype(whh0.dtype), whh0,
                                   preferred_element_type=jnp.float32))
        h0 = jnp.where(valid, n0, h0)
        cat_ref[:, :Hp] = h0.astype(cat_ref.dtype)         # layer-1 fused-dot operand
        n1 = jnp.tanh(jnp.dot(cat_ref[...], w1,
                              preferred_element_type=jnp.float32) + b1)
        h1 = jnp.where(valid, n1, h1)
        cat_ref[:, Hp:] = h1.astype(cat_ref.dtype)         # carry for next step
        return h0, h1

    if T <= 16:
        # short static trip count: full unroll, static offsets, full LLO visibility
        for t in range(T):
            h0, h1 = step(t, h0, h1, t * Bt)
    else:
        # long sequences / big tiles: bounded unroll keeps vreg pressure in check
        def body(t, carry):
            c0, c1 = carry
            off = pl.multiple_of(t * Bt, Bt)
            return step(t, c0, c1, off)
        h0, h1 = lax.fori_loop(0, T, body, (h0, h1), unroll=2)

    # z = hidden.permute(1,0,2).view(B, L*H): layer-0 block then layer-1 block.
    # Both halves are 128-lane aligned -> unmasked stores.
    z_ref[:, :Hp] = h0.astype(z_ref.dtype)
    z_ref[:, Hp:] = h1.astype(z_ref.dtype)


def rnn_classifier_forward(x_btd, lengths, h_init, params):
    """x_btd: (B, T, D) f32; lengths: (B,) int; h_init: (L, 1, H); params: per-layer weights."""
    B, T, D = x_btd.shape
    H = h_init.shape[-1]
    (wih0, whh0, b0), (wih1, whh1, b1) = params

    f32 = jnp.float32
    mmdt = MATMUL_DTYPE
    Hp = _round_up(H, LANE)

    # --- batch tiling: up to 256 rows per tile (MXU height on v6e/v7x); when the
    # batch is big enough split into >= 2 "parallel" tiles so both v7x TensorCores
    # (and the pipeline) stay busy.
    Bp0 = _round_up(B, 8)
    n_tiles = pl.cdiv(Bp0, MAX_B_TILE)
    if n_tiles == 1 and Bp0 > 128:
        n_tiles = 2
    b_tile = _round_up(pl.cdiv(Bp0, n_tiles), 8)
    Bp = b_tile * n_tiles

    # time-major, batch-padded input; D left UNPADDED (no 8x HBM inflation); bf16 operand
    x_p = jnp.zeros((T, Bp, D), mmdt).at[:, :B, :].set(
        jnp.transpose(x_btd, (1, 0, 2)).astype(mmdt))
    # lengths (Bp, 1); padded rows get length 0 (stay at init, sliced off later)
    len_p = jnp.zeros((Bp, 1), jnp.int32).at[:B, 0].set(lengths.astype(jnp.int32))
    # initial hidden self.hidden (L, 1, H), zero-padded along H; batch-broadcast in-kernel
    hinit_p = jnp.zeros((L, 1, Hp), f32).at[:, :, :H].set(h_init.astype(f32))
    # layer-0 weights (stored transposed for right-multiplication); bias = b_ih + b_hh
    wih0_p = jnp.zeros((D, Hp), mmdt).at[:, :H].set(wih0.astype(mmdt))
    whh0_p = jnp.zeros((Hp, Hp), mmdt).at[:H, :H].set(whh0.astype(mmdt))
    b0_p = jnp.zeros((1, Hp), f32).at[:, :H].set(b0.astype(f32))
    # layer-1: stack [Wih1 ; Whh1] so the recurrence needs a single fused matmul
    w1_p = jnp.zeros((2 * Hp, Hp), mmdt)
    w1_p = w1_p.at[:H, :H].set(wih1.astype(mmdt))
    w1_p = w1_p.at[Hp:Hp + H, :H].set(whh1.astype(mmdt))
    b1_p = jnp.zeros((1, Hp), f32).at[:, :H].set(b1.astype(f32))

    grid = (n_tiles,)
    z_p = pl.pallas_call(
        rnn_kernel,
        out_shape=jax.ShapeDtypeStruct((Bp, 2 * Hp), f32),
        grid_spec=pltpu.PrefetchScalarGridSpec(
            num_scalar_prefetch=0,
            grid=grid,
            in_specs=[
                pl.BlockSpec((T, b_tile, D), lambda b: (0, b, 0)),      # x (batch tiled)
                pl.BlockSpec((b_tile, 1), lambda b: (b, 0)),            # lengths
                pl.BlockSpec((L, 1, Hp), lambda b: (0, 0, 0)),          # h_init
                pl.BlockSpec((D, Hp), lambda b: (0, 0)),                # Wih0
                pl.BlockSpec((Hp, Hp), lambda b: (0, 0)),               # Whh0
                pl.BlockSpec((1, Hp), lambda b: (0, 0)),                # b0
                pl.BlockSpec((2 * Hp, Hp), lambda b: (0, 0)),           # [Wih1;Whh1]
                pl.BlockSpec((1, Hp), lambda b: (0, 0)),                # b1
            ],
            out_specs=pl.BlockSpec((b_tile, 2 * Hp), lambda b: (b, 0)),
            scratch_shapes=[
                pltpu.VMEM((T * b_tile, Hp), f32),       # hoisted input projection
                pltpu.VMEM((b_tile, 2 * Hp), mmdt),      # persistent [h0|h1] carry buffer
            ],
        ),
        compiler_params=pltpu.CompilerParams(
            dimension_semantics=("parallel",)),
        # NOTE: for very large T * b_tile on v5e (16 MiB scoped VMEM default), add
        # vmem_limit_bytes=... here; at <=256 rows / bf16 operands it is unnecessary.
    )(x_p, len_p, hinit_p, wih0_p, whh0_p, b0_p, w1_p, b1_p)

    # strip padding: [layer-0 hidden | layer-1 hidden] per batch row
    return jnp.concatenate([z_p[:B, :H], z_p[:B, Hp:Hp + H]], axis=-1)


def _reference_forward(x_btd, lengths, h_init, params, matmul_dtype=jnp.float32):
    """Pure-JAX reference of the packed-sequence multi-layer tanh RNN final hidden.

    matmul_dtype lets the reference mirror the kernel's bf16-operand / f32-accumulate
    MXU math for tight comparison."""
    B, T, D = x_btd.shape
    H = h_init.shape[-1]
    (wih0, whh0, b0), (wih1, whh1, b1) = params

    def dot(a, b):
        return jnp.dot(a.astype(matmul_dtype), b.astype(matmul_dtype),
                       preferred_element_type=jnp.float32)

    h0 = jnp.broadcast_to(h_init[0], (B, H)).astype(jnp.float32)
    h1 = jnp.broadcast_to(h_init[1], (B, H)).astype(jnp.float32)
    for t in range(T):
        x_t = x_btd[:, t, :]
        valid = (lengths.reshape(B, 1) > t)
        n0 = jnp.tanh(dot(x_t, wih0) + dot(h0, whh0) + b0)
        h0 = jnp.where(valid, n0, h0)
        n1 = jnp.tanh(dot(h0, wih1) + dot(h1, whh1) + b1)
        h1 = jnp.where(valid, n1, h1)
    return jnp.concatenate([h0, h1], axis=-1)


if __name__ == "__main__":
    # small shapes implied by the module: batch=4, seq=8, input_dim=16, hidden=32, layer_n=2
    B, T, D, H = 4, 8, 16, 32

    key = jax.random.PRNGKey(0)
    k = jax.random.split(key, 9)
    scale = 0.1
    x = jax.random.normal(k[0], (B, T, D), dtype=jnp.float32)
    lengths = jnp.array([8, 6, 5, 3], dtype=jnp.int32)        # sorted desc, as pack_padded requires
    h_init = scale * jax.random.normal(k[1], (L, 1, H), dtype=jnp.float32)   # self.hidden

    # deterministic weights (stored transposed for right-multiplication); bias = b_ih + b_hh
    params = (
        (scale * jax.random.normal(k[2], (D, H), dtype=jnp.float32),
         scale * jax.random.normal(k[3], (H, H), dtype=jnp.float32),
         scale * jax.random.normal(k[4], (1, H), dtype=jnp.float32)),
        (scale * jax.random.normal(k[5], (H, H), dtype=jnp.float32),
         scale * jax.random.normal(k[6], (H, H), dtype=jnp.float32),
         scale * jax.random.normal(k[7], (1, H), dtype=jnp.float32)),
    )

    z = rnn_classifier_forward(x, lengths, h_init, params)
    z = jax.block_until_ready(z)
    assert z.shape == (B, L * H)

    # tight check vs a reference that mirrors the kernel's bf16-operand MXU math
    z_ref_bf16 = _reference_forward(x, lengths, h_init, params, matmul_dtype=MATMUL_DTYPE)
    assert jnp.allclose(z, z_ref_bf16, atol=2e-4, rtol=2e-4), \
        "mismatch vs bf16-operand reference"
    # loose sanity check vs the exact f32 reference (bounds bf16 operand rounding error)
    z_ref_f32 = _reference_forward(x, lengths, h_init, params, matmul_dtype=jnp.float32)
    assert jnp.allclose(z, z_ref_f32, atol=5e-2, rtol=5e-2), \
        "bf16 operand error vs f32 reference larger than expected"

    # TODO(synk): torch.load-based parameters replaced by deterministic init (no checkpoint here).
    print("KERNEL_OK")
</pallas_src>

<mosaic_0001>
module attributes {stable_mosaic.version = 11 : i64} {
  func.func @rnn_kernel(%arg0: i32, %arg1: memref<8x8x16xbf16, #tpu.memory_space<vmem>>, %arg2: memref<8x1xi32, #tpu.memory_space<vmem>>, %arg3: memref<2x1x128xf32, #tpu.memory_space<vmem>>, %arg4: memref<16x128xbf16, #tpu.memory_space<vmem>>, %arg5: memref<128x128xbf16, #tpu.memory_space<vmem>>, %arg6: memref<1x128xf32, #tpu.memory_space<vmem>>, %arg7: memref<256x128xbf16, #tpu.memory_space<vmem>>, %arg8: memref<1x128xf32, #tpu.memory_space<vmem>>, %arg9: memref<8x256xf32, #tpu.memory_space<vmem>>, %arg10: memref<64x128xf32, #tpu.memory_space<vmem>>, %arg11: memref<8x256xbf16, #tpu.memory_space<vmem>>) attributes {dimension_semantics = [#tpu.dimension_semantics<parallel>], iteration_bounds = array<i64: 1>, scalar_prefetch = 0 : i64, scratch_operands = 2 : i64, tpu.core_type = #tpu.core_type<tc>, window_params = [{transform_indices = @transform_0, window_bounds = array<i64: 8, 8, 16>}, {transform_indices = @transform_1, window_bounds = array<i64: 8, 1>}, {pipeline_mode = #tpu.pipeline_mode<synchronous>, transform_indices = @transform_2, window_bounds = array<i64: 2, 1, 128>}, {pipeline_mode = #tpu.pipeline_mode<synchronous>, transform_indices = @transform_3, window_bounds = array<i64: 16, 128>}, {pipeline_mode = #tpu.pipeline_mode<synchronous>, transform_indices = @transform_4, window_bounds = array<i64: 128, 128>}, {pipeline_mode = #tpu.pipeline_mode<synchronous>, transform_indices = @transform_5, window_bounds = array<i64: 1, 128>}, {pipeline_mode = #tpu.pipeline_mode<synchronous>, transform_indices = @transform_6, window_bounds = array<i64: 256, 128>}, {pipeline_mode = #tpu.pipeline_mode<synchronous>, transform_indices = @transform_7, window_bounds = array<i64: 1, 128>}, {transform_indices = @transform_8, window_bounds = array<i64: 8, 256>}]} {
    %c0 = arith.constant 0 : index
    %c0_0 = arith.constant 0 : index
    %c0_1 = arith.constant 0 : index
    %0 = vector.load %arg1[%c0, %c0_0, %c0_1] : memref<8x8x16xbf16, #tpu.memory_space<vmem>>, vector<8x8x16xbf16>
    %1 = vector.shape_cast %0 : vector<8x8x16xbf16> to vector<64x16xbf16>
    %c0_2 = arith.constant 0 : index
    %c0_3 = arith.constant 0 : index
    %2 = vector.load %arg4[%c0_2, %c0_3] : memref<16x128xbf16, #tpu.memory_space<vmem>>, vector<16x128xbf16>
    %cst = arith.constant dense<0.000000e+00> : vector<64x128xf32>
    %3 = tpu.matmul %1, %2, %cst {dimension_numbers = #tpu.dot_dimension_numbers<[1], [0], [0], [1], [0, 0, 1, 1], [], []>} : vector<64x16xbf16>, vector<16x128xbf16>, vector<64x128xf32> -> vector<64x128xf32>
    %c0_4 = arith.constant 0 : index
    %c0_5 = arith.constant 0 : index
    %4 = vector.load %arg6[%c0_4, %c0_5] : memref<1x128xf32, #tpu.memory_space<vmem>>, vector<1x128xf32>
    %5 = vector.broadcast %4 : vector<1x128xf32> to vector<64x128xf32>
    %6 = arith.addf %3, %5 : vector<64x128xf32>
    %c0_6 = arith.constant 0 : index
    %c0_7 = arith.constant 0 : index
    %7 = vector.load %arg10[%c0_6, %c0_7] : memref<64x128xf32, #tpu.memory_space<vmem>>, vector<64x128xf32>
    tpu.vector_store %arg10[%c0_6, %c0_7], %6 {strides = array<i32>} : memref<64x128xf32, #tpu.memory_space<vmem>>, vector<64x128xf32>,
    %c0_8 = arith.constant 0 : index
    %c0_9 = arith.constant 0 : index
    %8 = vector.load %arg2[%c0_8, %c0_9] : memref<8x1xi32, #tpu.memory_space<vmem>>, vector<8x1xi32>
    %c0_10 = arith.constant 0 : index
    %c0_11 = arith.constant 0 : index
    %9 = vector.load %arg5[%c0_10, %c0_11] : memref<128x128xbf16, #tpu.memory_space<vmem>>, vector<128x128xbf16>
    %c0_12 = arith.constant 0 : index
    %c0_13 = arith.constant 0 : index
    %10 = vector.load %arg7[%c0_12, %c0_13] : memref<256x128xbf16, #tpu.memory_space<vmem>>, vector<256x128xbf16>
    %c0_14 = arith.constant 0 : index
    %c0_15 = arith.constant 0 : index
    %11 = vector.load %arg8[%c0_14, %c0_15] : memref<1x128xf32, #tpu.memory_space<vmem>>, vector<1x128xf32>
    %12 = vector.shape_cast %11 : vector<1x128xf32> to vector<1x128xf32>
    %13 = vector.broadcast %12 : vector<1x128xf32> to vector<8x128xf32>
    %c0_16 = arith.constant 0 : index
    %c0_17 = arith.constant 0 : index
    %c0_18 = arith.constant 0 : index
    %14 = vector.load %arg3[%c0_16, %c0_17, %c0_18] : memref<2x1x128xf32, #tpu.memory_space<vmem>>, vector<1x1x128xf32>
    %15 = vector.shape_cast %14 : vector<1x1x128xf32> to vector<1x128xf32>
    %16 = vector.shape_cast %15 : vector<1x128xf32> to vector<1x128xf32>
    %17 = vector.broadcast %16 : vector<1x128xf32> to vector<8x128xf32>
    %c1 = arith.constant 1 : index
    %c0_19 = arith.constant 0 : index
    %c0_20 = arith.constant 0 : index
    %18 = vector.load %arg3[%c1, %c0_19, %c0_20] : memref<2x1x128xf32, #tpu.memory_space<vmem>>, vector<1x1x128xf32>
    %19 = vector.shape_cast %18 : vector<1x1x128xf32> to vector<1x128xf32>
    %20 = vector.shape_cast %19 : vector<1x128xf32> to vector<1x128xf32>
    %21 = vector.broadcast %20 : vector<1x128xf32> to vector<8x128xf32>
    %22 = arith.truncf %21 : vector<8x128xf32> to vector<8x128xbf16>
    %c0_21 = arith.constant 0 : index
    %c128 = arith.constant 128 : index
    %23 = vector.load %arg11[%c0_21, %c128] : memref<8x256xbf16, #tpu.memory_space<vmem>>, vector<8x128xbf16>
    tpu.vector_store %arg11[%c0_21, %c128], %22 {strides = array<i32>} : memref<8x256xbf16, #tpu.memory_space<vmem>>, vector<8x128xbf16>,
    %c0_i32 = arith.constant 0 : i32
    %24 = vector.broadcast %c0_i32 : i32 to vector<8x1xi32>
    %25 = arith.cmpi sgt, %8, %24 : vector<8x1xi32>
    %c0_22 = arith.constant 0 : index
    %c0_23 = arith.constant 0 : index
    %26 = vector.load %arg10[%c0_22, %c0_23] : memref<64x128xf32, #tpu.memory_space<vmem>>, vector<8x128xf32>
    %27 = arith.truncf %17 : vector<8x128xf32> to vector<8x128xbf16>
    %cst_24 = arith.constant dense<0.000000e+00> : vector<8x128xf32>
    %28 = tpu.matmul %27, %9, %cst_24 {dimension_numbers = #tpu.dot_dimension_numbers<[1], [0], [0], [1], [0, 0, 1, 1], [], []>} : vector<8x128xbf16>, vector<128x128xbf16>, vector<8x128xf32> -> vector<8x128xf32>
    %29 = arith.addf %26, %28 : vector<8x128xf32>
    %30 = math.tanh %29 : vector<8x128xf32>
    %31 = vector.shape_cast %25 : vector<8x1xi1> to vector<8x1xi1>
    %32 = vector.broadcast %31 : vector<8x1xi1> to vector<8x128xi1>
    %33 = arith.select %32, %30, %17 : vector<8x128xi1>, vector<8x128xf32>
    %34 = arith.truncf %33 : vector<8x128xf32> to vector<8x128xbf16>
    %c0_25 = arith.constant 0 : index
    %c0_26 = arith.constant 0 : index
    %35 = vector.load %arg11[%c0_25, %c0_26] : memref<8x256xbf16, #tpu.memory_space<vmem>>, vector<8x128xbf16>
    tpu.vector_store %arg11[%c0_25, %c0_26], %34 {strides = array<i32>} : memref<8x256xbf16, #tpu.memory_space<vmem>>, vector<8x128xbf16>,
    %c0_27 = arith.constant 0 : index
    %c0_28 = arith.constant 0 : index
    %36 = vector.load %arg11[%c0_27, %c0_28] : memref<8x256xbf16, #tpu.memory_space<vmem>>, vector<8x256xbf16>
    %cst_29 = arith.constant dense<0.000000e+00> : vector<8x128xf32>
    %37 = tpu.matmul %36, %10, %cst_29 {dimension_numbers = #tpu.dot_dimension_numbers<[1], [0], [0], [1], [0, 0, 1, 1], [], []>} : vector<8x256xbf16>, vector<256x128xbf16>, vector<8x128xf32> -> vector<8x128xf32>
    %38 = arith.addf %37, %13 : vector<8x128xf32>
    %39 = math.tanh %38 : vector<8x128xf32>
    %40 = vector.shape_cast %25 : vector<8x1xi1> to vector<8x1xi1>
    %41 = vector.broadcast %40 : vector<8x1xi1> to vector<8x128xi1>
    %42 = arith.select %41, %39, %21 : vector<8x128xi1>, vector<8x128xf32>
    %43 = arith.truncf %42 : vector<8x128xf32> to vector<8x128xbf16>
    %c0_30 = arith.constant 0 : index
    %c128_31 = arith.constant 128 : index
    %44 = vector.load %arg11[%c0_30, %c128_31] : memref<8x256xbf16, #tpu.memory_space<vmem>>, vector<8x128xbf16>
    tpu.vector_store %arg11[%c0_30, %c128_31], %43 {strides = array<i32>} : memref<8x256xbf16, #tpu.memory_space<vmem>>, vector<8x128xbf16>,
    %c1_i32 = arith.constant 1 : i32
    %45 = vector.broadcast %c1_i32 : i32 to vector<8x1xi32>
    %46 = arith.cmpi sgt, %8, %45 : vector<8x1xi32>
    %c8 = arith.constant 8 : index
    %c0_32 = arith.constant 0 : index
    %47 = vector.load %arg10[%c8, %c0_32] : memref<64x128xf32, #tpu.memory_space<vmem>>, vector<8x128xf32>
    %48 = arith.truncf %33 : vector<8x128xf32> to vector<8x128xbf16>
    %cst_33 = arith.constant dense<0.000000e+00> : vector<8x128xf32>
    %49 = tpu.matmul %48, %9, %cst_33 {dimension_numbers = #tpu.dot_dimension_numbers<[1], [0], [0], [1], [0, 0, 1, 1], [], []>} : vector<8x128xbf16>, vector<128x128xbf16>, vector<8x128xf32> -> vector<8x128xf32>
    %50 = arith.addf %47, %49 : vector<8x128xf32>
    %51 = math.tanh %50 : vector<8x128xf32>
    %52 = vector.shape_cast %46 : vector<8x1xi1> to vector<8x1xi1>
    %53 = vector.broadcast %52 : vector<8x1xi1> to vector<8x128xi1>
    %54 = arith.select %53, %51, %33 : vector<8x128xi1>, vector<8x128xf32>
    %55 = arith.truncf %54 : vector<8x128xf32> to vector<8x128xbf16>
    %c0_34 = arith.constant 0 : index
    %c0_35 = arith.constant 0 : index
    %56 = vector.load %arg11[%c0_34, %c0_35] : memref<8x256xbf16, #tpu.memory_space<vmem>>, vector<8x128xbf16>
    tpu.vector_store %arg11[%c0_34, %c0_35], %55 {strides = array<i32>} : memref<8x256xbf16, #tpu.memory_space<vmem>>, vector<8x128xbf16>,
    %c0_36 = arith.constant 0 : index
    %c0_37 = arith.constant 0 : index
    %57 = vector.load %arg11[%c0_36, %c0_37] : memref<8x256xbf16, #tpu.memory_space<vmem>>, vector<8x256xbf16>
    %cst_38 = arith.constant dense<0.000000e+00> : vector<8x128xf32>
    %58 = tpu.matmul %57, %10, %cst_38 {dimension_numbers = #tpu.dot_dimension_numbers<[1], [0], [0], [1], [0, 0, 1, 1], [], []>} : vector<8x256xbf16>, vector<256x128xbf16>, vector<8x128xf32> -> vector<8x128xf32>
    %59 = arith.addf %58, %13 : vector<8x128xf32>
    %60 = math.tanh %59 : vector<8x128xf32>
    %61 = vector.shape_cast %46 : vector<8x1xi1> to vector<8x1xi1>
    %62 = vector.broadcast %61 : vector<8x1xi1> to vector<8x128xi1>
    %63 = arith.select %62, %60, %42 : vector<8x128xi1>, vector<8x128xf32>
    %64 = arith.truncf %63 : vector<8x128xf32> to vector<8x128xbf16>
    %c0_39 = arith.constant 0 : index
    %c128_40 = arith.constant 128 : index
    %65 = vector.load %arg11[%c0_39, %c128_40] : memref<8x256xbf16, #tpu.memory_space<vmem>>, vector<8x128xbf16>
    tpu.vector_store %arg11[%c0_39, %c128_40], %64 {strides = array<i32>} : memref<8x256xbf16, #tpu.memory_space<vmem>>, vector<8x128xbf16>,
    %c2_i32 = arith.constant 2 : i32
    %66 = vector.broadcast %c2_i32 : i32 to vector<8x1xi32>
    %67 = arith.cmpi sgt, %8, %66 : vector<8x1xi32>
    %c16 = arith.constant 16 : index
    %c0_41 = arith.constant 0 : index
    %68 = vector.load %arg10[%c16, %c0_41] : memref<64x128xf32, #tpu.memory_space<vmem>>, vector<8x128xf32>
    %69 = arith.truncf %54 : vector<8x128xf32> to vector<8x128xbf16>
    %cst_42 = arith.constant dense<0.000000e+00> : vector<8x128xf32>
    %70 = tpu.matmul %69, %9, %cst_42 {dimension_numbers = #tpu.dot_dimension_numbers<[1], [0], [0], [1], [0, 0, 1, 1], [], []>} : vector<8x128xbf16>, vector<128x128xbf16>, vector<8x128xf32> -> vector<8x128xf32>
    %71 = arith.addf %68, %70 : vector<8x128xf32>
    %72 = math.tanh %71 : vector<8x128xf32>
    %73 = vector.shape_cast %67 : vector<8x1xi1> to vector<8x1xi1>
    %74 = vector.broadcast %73 : vector<8x1xi1> to vector<8x128xi1>
    %75 = arith.select %74, %72, %54 : vector<8x128xi1>, vector<8x128xf32>
    %76 = arith.truncf %75 : vector<8x128xf32> to vector<8x128xbf16>
    %c0_43 = arith.constant 0 : index
    %c0_44 = arith.constant 0 : index
    %77 = vector.load %arg11[%c0_43, %c0_44] : memref<8x256xbf16, #tpu.memory_space<vmem>>, vector<8x128xbf16>
    tpu.vector_store %arg11[%c0_43, %c0_44], %76 {strides = array<i32>} : memref<8x256xbf16, #tpu.memory_space<vmem>>, vector<8x128xbf16>,
    %c0_45 = arith.constant 0 : index
    %c0_46 = arith.constant 0 : index
    %78 = vector.load %arg11[%c0_45, %c0_46] : memref<8x256xbf16, #tpu.memory_space<vmem>>, vector<8x256xbf16>
    %cst_47 = arith.constant dense<0.000000e+00> : vector<8x128xf32>
    %79 = tpu.matmul %78, %10, %cst_47 {dimension_numbers = #tpu.dot_dimension_numbers<[1], [0], [0], [1], [0, 0, 1, 1], [], []>} : vector<8x256xbf16>, vector<256x128xbf16>, vector<8x128xf32> -> vector<8x128xf32>
    %80 = arith.addf %79, %13 : vector<8x128xf32>
    %81 = math.tanh %80 : vector<8x128xf32>
    %82 = vector.shape_cast %67 : vector<8x1xi1> to vector<8x1xi1>
    %83 = vector.broadcast %82 : vector<8x1xi1> to vector<8x128xi1>
    %84 = arith.select %83, %81, %63 : vector<8x128xi1>, vector<8x128xf32>
    %85 = arith.truncf %84 : vector<8x128xf32> to vector<8x128xbf16>
    %c0_48 = arith.constant 0 : index
    %c128_49 = arith.constant 128 : index
    %86 = vector.load %arg11[%c0_48, %c128_49] : memref<8x256xbf16, #tpu.memory_space<vmem>>, vector<8x128xbf16>
    tpu.vector_store %arg11[%c0_48, %c128_49], %85 {strides = array<i32>} : memref<8x256xbf16, #tpu.memory_space<vmem>>, vector<8x128xbf16>,
    %c3_i32 = arith.constant 3 : i32
    %87 = vector.broadcast %c3_i32 : i32 to vector<8x1xi32>
    %88 = arith.cmpi sgt, %8, %87 : vector<8x1xi32>
    %c24 = arith.constant 24 : index
    %c0_50 = arith.constant 0 : index
    %89 = vector.load %arg10[%c24, %c0_50] : memref<64x128xf32, #tpu.memory_space<vmem>>, vector<8x128xf32>
    %90 = arith.truncf %75 : vector<8x128xf32> to vector<8x128xbf16>
    %cst_51 = arith.constant dense<0.000000e+00> : vector<8x128xf32>
    %91 = tpu.matmul %90, %9, %cst_51 {dimension_numbers = #tpu.dot_dimension_numbers<[1], [0], [0], [1], [0, 0, 1, 1], [], []>} : vector<8x128xbf16>, vector<128x128xbf16>, vector<8x128xf32> -> vector<8x128xf32>
    %92 = arith.addf %89, %91 : vector<8x128xf32>
    %93 = math.tanh %92 : vector<8x128xf32>
    %94 = vector.shape_cast %88 : vector<8x1xi1> to vector<8x1xi1>
    %95 = vector.broadcast %94 : vector<8x1xi1> to vector<8x128xi1>
    %96 = arith.select %95, %93, %75 : vector<8x128xi1>, vector<8x128xf32>
    %97 = arith.truncf %96 : vector<8x128xf32> to vector<8x128xbf16>
    %c0_52 = arith.constant 0 : index
    %c0_53 = arith.constant 0 : index
    %98 = vector.load %arg11[%c0_52, %c0_53] : memref<8x256xbf16, #tpu.memory_space<vmem>>, vector<8x128xbf16>
    tpu.vector_store %arg11[%c0_52, %c0_53], %97 {strides = array<i32>} : memref<8x256xbf16, #tpu.memory_space<vmem>>, vector<8x128xbf16>,
    %c0_54 = arith.constant 0 : index
    %c0_55 = arith.constant 0 : index
    %99 = vector.load %arg11[%c0_54, %c0_55] : memref<8x256xbf16, #tpu.memory_space<vmem>>, vector<8x256xbf16>
    %cst_56 = arith.constant dense<0.000000e+00> : vector<8x128xf32>
    %100 = tpu.matmul %99, %10, %cst_56 {dimension_numbers = #tpu.dot_dimension_numbers<[1], [0], [0], [1], [0, 0, 1, 1], [], []>} : vector<8x256xbf16>, vector<256x128xbf16>, vector<8x128xf32> -> vector<8x128xf32>
    %101 = arith.addf %100, %13 : vector<8x128xf32>
    %102 = math.tanh %101 : vector<8x128xf32>
    %103 = vector.shape_cast %88 : vector<8x1xi1> to vector<8x1xi1>
    %104 = vector.broadcast %103 : vector<8x1xi1> to vector<8x128xi1>
    %105 = arith.select %104, %102, %84 : vector<8x128xi1>, vector<8x128xf32>
    %106 = arith.truncf %105 : vector<8x128xf32> to vector<8x128xbf16>
    %c0_57 = arith.constant 0 : index
    %c128_58 = arith.constant 128 : index
    %107 = vector.load %arg11[%c0_57, %c128_58] : memref<8x256xbf16, #tpu.memory_space<vmem>>, vector<8x128xbf16>
    tpu.vector_store %arg11[%c0_57, %c128_58], %106 {strides = array<i32>} : memref<8x256xbf16, #tpu.memory_space<vmem>>, vector<8x128xbf16>,
    %c4_i32 = arith.constant 4 : i32
    %108 = vector.broadcast %c4_i32 : i32 to vector<8x1xi32>
    %109 = arith.cmpi sgt, %8, %108 : vector<8x1xi32>
    %c32 = arith.constant 32 : index
    %c0_59 = arith.constant 0 : index
    %110 = vector.load %arg10[%c32, %c0_59] : memref<64x128xf32, #tpu.memory_space<vmem>>, vector<8x128xf32>
    %111 = arith.truncf %96 : vector<8x128xf32> to vector<8x128xbf16>
    %cst_60 = arith.constant dense<0.000000e+00> : vector<8x128xf32>
    %112 = tpu.matmul %111, %9, %cst_60 {dimension_numbers = #tpu.dot_dimension_numbers<[1], [0], [0], [1], [0, 0, 1, 1], [], []>} : vector<8x128xbf16>, vector<128x128xbf16>, vector<8x128xf32> -> vector<8x128xf32>
    %113 = arith.addf %110, %112 : vector<8x128xf32>
    %114 = math.tanh %113 : vector<8x128xf32>
    %115 = vector.shape_cast %109 : vector<8x1xi1> to vector<8x1xi1>
    %116 = vector.broadcast %115 : vector<8x1xi1> to vector<8x128xi1>
    %117 = arith.select %116, %114, %96 : vector<8x128xi1>, vector<8x128xf32>
    %118 = arith.truncf %117 : vector<8x128xf32> to vector<8x128xbf16>
    %c0_61 = arith.constant 0 : index
    %c0_62 = arith.constant 0 : index
    %119 = vector.load %arg11[%c0_61, %c0_62] : memref<8x256xbf16, #tpu.memory_space<vmem>>, vector<8x128xbf16>
    tpu.vector_store %arg11[%c0_61, %c0_62], %118 {strides = array<i32>} : memref<8x256xbf16, #tpu.memory_space<vmem>>, vector<8x128xbf16>,
    %c0_63 = arith.constant 0 : index
    %c0_64 = arith.constant 0 : index
    %120 = vector.load %arg11[%c0_63, %c0_64] : memref<8x256xbf16, #tpu.memory_space<vmem>>, vector<8x256xbf16>
    %cst_65 = arith.constant dense<0.000000e+00> : vector<8x128xf32>
    %121 = tpu.matmul %120, %10, %cst_65 {dimension_numbers = #tpu.dot_dimension_numbers<[1], [0], [0], [1], [0, 0, 1, 1], [], []>} : vector<8x256xbf16>, vector<256x128xbf16>, vector<8x128xf32> -> vector<8x128xf32>
    %122 = arith.addf %121, %13 : vector<8x128xf32>
    %123 = math.tanh %122 : vector<8x128xf32>
    %124 = vector.shape_cast %109 : vector<8x1xi1> to vector<8x1xi1>
    %125 = vector.broadcast %124 : vector<8x1xi1> to vector<8x128xi1>
    %126 = arith.select %125, %123, %105 : vector<8x128xi1>, vector<8x128xf32>
    %127 = arith.truncf %126 : vector<8x128xf32> to vector<8x128xbf16>
    %c0_66 = arith.constant 0 : index
    %c128_67 = arith.constant 128 : index
    %128 = vector.load %arg11[%c0_66, %c128_67] : memref<8x256xbf16, #tpu.memory_space<vmem>>, vector<8x128xbf16>
    tpu.vector_store %arg11[%c0_66, %c128_67], %127 {strides = array<i32>} : memref<8x256xbf16, #tpu.memory_space<vmem>>, vector<8x128xbf16>,
    %c5_i32 = arith.constant 5 : i32
    %129 = vector.broadcast %c5_i32 : i32 to vector<8x1xi32>
    %130 = arith.cmpi sgt, %8, %129 : vector<8x1xi32>
    %c40 = arith.constant 40 : index
    %c0_68 = arith.constant 0 : index
    %131 = vector.load %arg10[%c40, %c0_68] : memref<64x128xf32, #tpu.memory_space<vmem>>, vector<8x128xf32>
    %132 = arith.truncf %117 : vector<8x128xf32> to vector<8x128xbf16>
    %cst_69 = arith.constant dense<0.000000e+00> : vector<8x128xf32>
    %133 = tpu.matmul %132, %9, %cst_69 {dimension_numbers = #tpu.dot_dimension_numbers<[1], [0], [0], [1], [0, 0, 1, 1], [], []>} : vector<8x128xbf16>, vector<128x128xbf16>, vector<8x128xf32> -> vector<8x128xf32>
    %134 = arith.addf %131, %133 : vector<8x128xf32>
    %135 = math.tanh %134 : vector<8x128xf32>
    %136 = vector.shape_cast %130 : vector<8x1xi1> to vector<8x1xi1>
    %137 = vector.broadcast %136 : vector<8x1xi1> to vector<8x128xi1>
    %138 = arith.select %137, %135, %117 : vector<8x128xi1>, vector<8x128xf32>
    %139 = arith.truncf %138 : vector<8x128xf32> to vector<8x128xbf16>
    %c0_70 = arith.constant 0 : index
    %c0_71 = arith.constant 0 : index
    %140 = vector.load %arg11[%c0_70, %c0_71] : memref<8x256xbf16, #tpu.memory_space<vmem>>, vector<8x128xbf16>
    tpu.vector_store %arg11[%c0_70, %c0_71], %139 {strides = array<i32>} : memref<8x256xbf16, #tpu.memory_space<vmem>>, vector<8x128xbf16>,
    %c0_72 = arith.constant 0 : index
    %c0_73 = arith.constant 0 : index
    %141 = vector.load %arg11[%c0_72, %c0_73] : memref<8x256xbf16, #tpu.memory_space<vmem>>, vector<8x256xbf16>
    %cst_74 = arith.constant dense<0.000000e+00> : vector<8x128xf32>
    %142 = tpu.matmul %141, %10, %cst_74 {dimension_numbers = #tpu.dot_dimension_numbers<[1], [0], [0], [1], [0, 0, 1, 1], [], []>} : vector<8x256xbf16>, vector<256x128xbf16>, vector<8x128xf32> -> vector<8x128xf32>
    %143 = arith.addf %142, %13 : vector<8x128xf32>
    %144 = math.tanh %143 : vector<8x128xf32>
    %145 = vector.shape_cast %130 : vector<8x1xi1> to vector<8x1xi1>
    %146 = vector.broadcast %145 : vector<8x1xi1> to vector<8x128xi1>
    %147 = arith.select %146, %144, %126 : vector<8x128xi1>, vector<8x128xf32>
    %148 = arith.truncf %147 : vector<8x128xf32> to vector<8x128xbf16>
    %c0_75 = arith.constant 0 : index
    %c128_76 = arith.constant 128 : index
    %149 = vector.load %arg11[%c0_75, %c128_76] : memref<8x256xbf16, #tpu.memory_space<vmem>>, vector<8x128xbf16>
    tpu.vector_store %arg11[%c0_75, %c128_76], %148 {strides = array<i32>} : memref<8x256xbf16, #tpu.memory_space<vmem>>, vector<8x128xbf16>,
    %c6_i32 = arith.constant 6 : i32
    %150 = vector.broadcast %c6_i32 : i32 to vector<8x1xi32>
    %151 = arith.cmpi sgt, %8, %150 : vector<8x1xi32>
    %c48 = arith.constant 48 : index
    %c0_77 = arith.constant 0 : index
    %152 = vector.load %arg10[%c48, %c0_77] : memref<64x128xf32, #tpu.memory_space<vmem>>, vector<8x128xf32>
    %153 = arith.truncf %138 : vector<8x128xf32> to vector<8x128xbf16>
    %cst_78 = arith.constant dense<0.000000e+00> : vector<8x128xf32>
    %154 = tpu.matmul %153, %9, %cst_78 {dimension_numbers = #tpu.dot_dimension_numbers<[1], [0], [0], [1], [0, 0, 1, 1], [], []>} : vector<8x128xbf16>, vector<128x128xbf16>, vector<8x128xf32> -> vector<8x128xf32>
    %155 = arith.addf %152, %154 : vector<8x128xf32>
    %156 = math.tanh %155 : vector<8x128xf32>
    %157 = vector.shape_cast %151 : vector<8x1xi1> to vector<8x1xi1>
    %158 = vector.broadcast %157 : vector<8x1xi1> to vector<8x128xi1>
    %159 = arith.select %158, %156, %138 : vector<8x128xi1>, vector<8x128xf32>
    %160 = arith.truncf %159 : vector<8x128xf32> to vector<8x128xbf16>
    %c0_79 = arith.constant 0 : index
    %c0_80 = arith.constant 0 : index
    %161 = vector.load %arg11[%c0_79, %c0_80] : memref<8x256xbf16, #tpu.memory_space<vmem>>, vector<8x128xbf16>
    tpu.vector_store %arg11[%c0_79, %c0_80], %160 {strides = array<i32>} : memref<8x256xbf16, #tpu.memory_space<vmem>>, vector<8x128xbf16>,
    %c0_81 = arith.constant 0 : index
    %c0_82 = arith.constant 0 : index
    %162 = vector.load %arg11[%c0_81, %c0_82] : memref<8x256xbf16, #tpu.memory_space<vmem>>, vector<8x256xbf16>
    %cst_83 = arith.constant dense<0.000000e+00> : vector<8x128xf32>
    %163 = tpu.matmul %162, %10, %cst_83 {dimension_numbers = #tpu.dot_dimension_numbers<[1], [0], [0], [1], [0, 0, 1, 1], [], []>} : vector<8x256xbf16>, vector<256x128xbf16>, vector<8x128xf32> -> vector<8x128xf32>
    %164 = arith.addf %163, %13 : vector<8x128xf32>
    %165 = math.tanh %164 : vector<8x128xf32>
    %166 = vector.shape_cast %151 : vector<8x1xi1> to vector<8x1xi1>
    %167 = vector.broadcast %166 : vector<8x1xi1> to vector<8x128xi1>
    %168 = arith.select %167, %165, %147 : vector<8x128xi1>, vector<8x128xf32>
    %169 = arith.truncf %168 : vector<8x128xf32> to vector<8x128xbf16>
    %c0_84 = arith.constant 0 : index
    %c128_85 = arith.constant 128 : index
    %170 = vector.load %arg11[%c0_84, %c128_85] : memref<8x256xbf16, #tpu.memory_space<vmem>>, vector<8x128xbf16>
    tpu.vector_store %arg11[%c0_84, %c128_85], %169 {strides = array<i32>} : memref<8x256xbf16, #tpu.memory_space<vmem>>, vector<8x128xbf16>,
    %c7_i32 = arith.constant 7 : i32
    %171 = vector.broadcast %c7_i32 : i32 to vector<8x1xi32>
    %172 = arith.cmpi sgt, %8, %171 : vector<8x1xi32>
    %c56 = arith.constant 56 : index
    %c0_86 = arith.constant 0 : index
    %173 = vector.load %arg10[%c56, %c0_86] : memref<64x128xf32, #tpu.memory_space<vmem>>, vector<8x128xf32>
    %174 = arith.truncf %159 : vector<8x128xf32> to vector<8x128xbf16>
    %cst_87 = arith.constant dense<0.000000e+00> : vector<8x128xf32>
    %175 = tpu.matmul %174, %9, %cst_87 {dimension_numbers = #tpu.dot_dimension_numbers<[1], [0], [0], [1], [0, 0, 1, 1], [], []>} : vector<8x128xbf16>, vector<128x128xbf16>, vector<8x128xf32> -> vector<8x128xf32>
    %176 = arith.addf %173, %175 : vector<8x128xf32>
    %177 = math.tanh %176 : vector<8x128xf32>
    %178 = vector.shape_cast %172 : vector<8x1xi1> to vector<8x1xi1>
    %179 = vector.broadcast %178 : vector<8x1xi1> to vector<8x128xi1>
    %180 = arith.select %179, %177, %159 : vector<8x128xi1>, vector<8x128xf32>
    %181 = arith.truncf %180 : vector<8x128xf32> to vector<8x128xbf16>
    %c0_88 = arith.constant 0 : index
    %c0_89 = arith.constant 0 : index
    %182 = vector.load %arg11[%c0_88, %c0_89] : memref<8x256xbf16, #tpu.memory_space<vmem>>, vector<8x128xbf16>
    tpu.vector_store %arg11[%c0_88, %c0_89], %181 {strides = array<i32>} : memref<8x256xbf16, #tpu.memory_space<vmem>>, vector<8x128xbf16>,
    %c0_90 = arith.constant 0 : index
    %c0_91 = arith.constant 0 : index
    %183 = vector.load %arg11[%c0_90, %c0_91] : memref<8x256xbf16, #tpu.memory_space<vmem>>, vector<8x256xbf16>
    %cst_92 = arith.constant dense<0.000000e+00> : vector<8x128xf32>
    %184 = tpu.matmul %183, %10, %cst_92 {dimension_numbers = #tpu.dot_dimension_numbers<[1], [0], [0], [1], [0, 0, 1, 1], [], []>} : vector<8x256xbf16>, vector<256x128xbf16>, vector<8x128xf32> -> vector<8x128xf32>
    %185 = arith.addf %184, %13 : vector<8x128xf32>
    %186 = math.tanh %185 : vector<8x128xf32>
    %187 = vector.shape_cast %172 : vector<8x1xi1> to vector<8x1xi1>
    %188 = vector.broadcast %187 : vector<8x1xi1> to vector<8x128xi1>
    %189 = arith.select %188, %186, %168 : vector<8x128xi1>, vector<8x128xf32>
    %190 = arith.truncf %189 : vector<8x128xf32> to vector<8x128xbf16>
    %c0_93 = arith.constant 0 : index
    %c128_94 = arith.constant 128 : index
    %191 = vector.load %arg11[%c0_93, %c128_94] : memref<8x256xbf16, #tpu.memory_space<vmem>>, vector<8x128xbf16>
    tpu.vector_store %arg11[%c0_93, %c128_94], %190 {strides = array<i32>} : memref<8x256xbf16, #tpu.memory_space<vmem>>, vector<8x128xbf16>,
    %c0_95 = arith.constant 0 : index
    %c0_96 = arith.constant 0 : index
    %192 = vector.load %arg9[%c0_95, %c0_96] : memref<8x256xf32, #tpu.memory_space<vmem>>, vector<8x128xf32>
    tpu.vector_store %arg9[%c0_95, %c0_96], %180 {strides = array<i32>} : memref<8x256xf32, #tpu.memory_space<vmem>>, vector<8x128xf32>,
    %c0_97 = arith.constant 0 : index
    %c128_98 = arith.constant 128 : index
    %193 = vector.load %arg9[%c0_97, %c128_98] : memref<8x256xf32, #tpu.memory_space<vmem>>, vector<8x128xf32>
    tpu.vector_store %arg9[%c0_97, %c128_98], %189 {strides = array<i32>} : memref<8x256xf32, #tpu.memory_space<vmem>>, vector<8x128xf32>,
    return
  }
  func.func @transform_0(%arg0: i32) -> (i32, i32, i32) {
    %c0_i32 = arith.constant 0 : i32
    %c0_i32_0 = arith.constant 0 : i32
    %c0_i32_1 = arith.constant 0 : i32
    return %c0_i32, %arg0, %c0_i32_0 : i32, i32, i32
  }
  func.func @transform_1(%arg0: i32) -> (i32, i32) {
    %c0_i32 = arith.constant 0 : i32
    %c0_i32_0 = arith.constant 0 : i32
    return %arg0, %c0_i32 : i32, i32
  }
  func.func @transform_2(%arg0: i32) -> (i32, i32, i32) {
    %c0_i32 = arith.constant 0 : i32
    %c0_i32_0 = arith.constant 0 : i32
    %c0_i32_1 = arith.constant 0 : i32
    %c0_i32_2 = arith.constant 0 : i32
    return %c0_i32, %c0_i32_0, %c0_i32_1 : i32, i32, i32
  }
  func.func @transform_3(%arg0: i32) -> (i32, i32) {
    %c0_i32 = arith.constant 0 : i32
    %c0_i32_0 = arith.constant 0 : i32
    %c0_i32_1 = arith.constant 0 : i32
    return %c0_i32, %c0_i32_0 : i32, i32
  }
  func.func @transform_4(%arg0: i32) -> (i32, i32) {
    %c0_i32 = arith.constant 0 : i32
    %c0_i32_0 = arith.constant 0 : i32
    %c0_i32_1 = arith.constant 0 : i32
    return %c0_i32, %c0_i32_0 : i32, i32
  }
  func.func @transform_5(%arg0: i32) -> (i32, i32) {
    %c0_i32 = arith.constant 0 : i32
    %c0_i32_0 = arith.constant 0 : i32
    %c0_i32_1 = arith.constant 0 : i32
    return %c0_i32, %c0_i32_0 : i32, i32
  }
  func.func @transform_6(%arg0: i32) -> (i32, i32) {
    %c0_i32 = arith.constant 0 : i32
    %c0_i32_0 = arith.constant 0 : i32
    %c0_i32_1 = arith.constant 0 : i32
    return %c0_i32, %c0_i32_0 : i32, i32
  }
  func.func @transform_7(%arg0: i32) -> (i32, i32) {
    %c0_i32 = arith.constant 0 : i32
    %c0_i32_0 = arith.constant 0 : i32
    %c0_i32_1 = arith.constant 0 : i32
    return %c0_i32, %c0_i32_0 : i32, i32
  }
  func.func @transform_8(%arg0: i32) -> (i32, i32) {
    %c0_i32 = arith.constant 0 : i32
    %c0_i32_0 = arith.constant 0 : i32
    return %arg0, %c0_i32 : i32, i32
  }
}

</mosaic_0001>

<llo_original>
// kernel: tpu_custom_call.1
$region0: #{tpu_custom_call.1}
  #allocation0 [shape = 'u32[]', space=smem, size = 0x4, offset = 0x4, fixed_abs, tag = 'smem constant byte address 0x4 - core index']
  #allocation1 [shape = 'u32[72,128]{1,0:T(1,128)}', space=vmem, size = 0x9000, scoped, tag = 'internal scratch']
  #allocation2 [shape = 'f32[64,128]{1,0:T(8,128)}', space=vmem, size = 0x8000, scoped, tag = 'scratch operand']
  #allocation3 [shape = 'bf16[8,256]{1,0:T(8,128)(2,1)}', space=vmem, size = 0x1000, scoped, tag = 'scratch operand']
  %s0 = inlined_call_operand.hbm [shape: bf16[8,8,16], index: 0, kind: input, shape index: {}]
  %s1 = inlined_call_operand.vmem [shape: s32[8,1], index: 1, kind: input, shape index: {}]
  %s2 = inlined_call_operand.vmem [shape: f32[2,1,128], index: 2, kind: input, shape index: {}]
  %s3 = inlined_call_operand.vmem [shape: bf16[16,128], index: 3, kind: input, shape index: {}]
  %s4 = inlined_call_operand.hbm [shape: bf16[128,128], index: 4, kind: input, shape index: {}]
  %s5 = inlined_call_operand.vmem [shape: f32[1,128], index: 5, kind: input, shape index: {}]
  %s6 = inlined_call_operand.hbm [shape: bf16[256,128], index: 6, kind: input, shape index: {}]
  %s7 = inlined_call_operand.vmem [shape: f32[1,128], index: 7, kind: input, shape index: {}]
  %s8 = inlined_call_operand.hbm [shape: f32[8,256], index: 8, kind: output, shape index: {}]
  %s9 = sld [smem:[#allocation0]]
  $region54: #{tpu_custom_call.1} parent=0
    _
  %s11 = ssub.s32 1, %s9
  %s12 = scalar_select 0, %s11, %s9
  $region1: #{tpu_custom_call.1} parent=0
    #allocation4 [shape = 'u8[16384]{0}', space=vmem, size = 0x4000, scoped, tag = 'input window, operand 0, single buffered']
    #allocation5 [shape = 's32[1]{0}', space=sflag, size = 0x4, scoped, tag = 'scoped memory for tpu_custom_call.1']
    #allocation6 [shape = 's32[1]{0}', space=sflag, size = 0x4, scoped, tag = 'scoped memory for tpu_custom_call.1']
    #allocation7 [shape = 'u8[32768]{0}', space=vmem, size = 0x8000, scoped, tag = 'input window, operand 4, single buffered']
    #allocation8 [shape = 's32[1]{0}', space=sflag, size = 0x4, scoped, tag = 'scoped memory for tpu_custom_call.1']
    #allocation9 [shape = 'u8[65536]{0}', space=vmem, size = 0x10000, scoped, tag = 'input window, operand 6, single buffered']
    #allocation10 [shape = 'u8[8192]{0}', space=vmem, size = 0x2000, scoped, tag = 'output window, operand 0, single buffered']
    %13 = vsyncpa [#allocation5], 0
    %14 = vsyncpa [#allocation8], 0
    %15 = vsyncpa [#allocation6], 0
    // Predicated region
    $region2: #{tpu_custom_call.1} parent=1 // pred_check
      _
    $region3: #{tpu_custom_call.1} parent=1 // pred_check_branch
      %17 = sbr.rel (0) target = $region5
    $region4: #{tpu_custom_call.1} parent=1 // pred_region
      %19 = vsyncadd [#allocation5], 0
      %s20 = sshll.u32 %s0, 4
      %s21 = int_to_ptr.hbm [resolvable:$true] %s20
      %s22 = sshll.u32 [#allocation4], 4
      %s23 = int_to_ptr.vmem [resolvable:$true] %s22
      %28 = dma.hbm_to_vmem [thread:$0]  %s21, 512, %s23, [#allocation5], 64, 64, 4
    $region5: #{tpu_custom_call.1} parent=1 // pred_fallthru
      _
    // Predicated region
    $region6: #{tpu_custom_call.1} parent=1 // pred_check
      _
    $region7: #{tpu_custom_call.1} parent=1 // pred_check_branch
      %30 = sbr.rel (0) target = $region9
    $region8: #{tpu_custom_call.1} parent=1 // pred_region
      _
    $region9: #{tpu_custom_call.1} parent=1 // pred_fallthru
      _
    // Predicated region
    $region10: #{tpu_custom_call.1} parent=1 // pred_check
      _
    $region11: #{tpu_custom_call.1} parent=1 // pred_check_branch
      %32 = sbr.rel (0) target = $region13
    $region12: #{tpu_custom_call.1} parent=1 // pred_region
      _
    $region13: #{tpu_custom_call.1} parent=1 // pred_fallthru
      _
    // Predicated region
    $region14: #{tpu_custom_call.1} parent=1 // pred_check
      _
    $region15: #{tpu_custom_call.1} parent=1 // pred_check_branch
      %34 = sbr.rel (0) target = $region17
    $region16: #{tpu_custom_call.1} parent=1 // pred_region
      _
    $region17: #{tpu_custom_call.1} parent=1 // pred_fallthru
      _
    // Predicated region
    $region18: #{tpu_custom_call.1} parent=1 // pred_check
      _
    $region19: #{tpu_custom_call.1} parent=1 // pred_check_branch
      %36 = sbr.rel (0) target = $region21
    $region20: #{tpu_custom_call.1} parent=1 // pred_region
      %38 = vsyncadd [#allocation8], 0
      %s39 = sshll.u32 %s4, 4
      %s40 = int_to_ptr.hbm [resolvable:$true] %s39
      %s41 = sshll.u32 [#allocation7], 4
      %s42 = int_to_ptr.vmem [resolvable:$true] %s41
      %47 = dma.hbm_to_vmem [thread:$0]  %s40, 1024, %s42, [#allocation8], 64, 64, 4
    $region21: #{tpu_custom_call.1} parent=1 // pred_fallthru
      _
    // Predicated region
    $region22: #{tpu_custom_call.1} parent=1 // pred_check
      _
    $region23: #{tpu_custom_call.1} parent=1 // pred_check_branch
      %49 = sbr.rel (0) target = $region25
    $region24: #{tpu_custom_call.1} parent=1 // pred_region
      _
    $region25: #{tpu_custom_call.1} parent=1 // pred_fallthru
      _
    // Predicated region
    $region26: #{tpu_custom_call.1} parent=1 // pred_check
      _
    $region27: #{tpu_custom_call.1} parent=1 // pred_check_branch
      %51 = sbr.rel (0) target = $region29
    $region28: #{tpu_custom_call.1} parent=1 // pred_region
      %53 = vsyncadd [#allocation8], 0
      %s54 = sshll.u32 %s6, 4
      %s55 = int_to_ptr.hbm [resolvable:$true] %s54
      %s56 = sshll.u32 [#allocation9], 4
      %s57 = int_to_ptr.vmem [resolvable:$true] %s56
      %62 = dma.hbm_to_vmem [thread:$0]  %s55, 2048, %s57, [#allocation8], 64, 64, 4
    $region29: #{tpu_custom_call.1} parent=1 // pred_fallthru
      _
    // Predicated region
    $region30: #{tpu_custom_call.1} parent=1 // pred_check
      _
    $region31: #{tpu_custom_call.1} parent=1 // pred_check_branch
      %64 = sbr.rel (0) target = $region33
    $region32: #{tpu_custom_call.1} parent=1 // pred_region
      _
    $region33: #{tpu_custom_call.1} parent=1 // pred_fallthru
      _
    // Predicated region
    $region34: #{tpu_custom_call.1} parent=1 // pred_check
      _
    $region35: #{tpu_custom_call.1} parent=1 // pred_check_branch
      %66 = sbr.rel (0) target = $region37
    $region36: #{tpu_custom_call.1} parent=1 // pred_region
      %68 = dma.done [#allocation5], 512
    $region37: #{tpu_custom_call.1} parent=1 // pred_fallthru
      _
    // Predicated region
    $region38: #{tpu_custom_call.1} parent=1 // pred_check
      _
    $region39: #{tpu_custom_call.1} parent=1 // pred_check_branch
      %70 = sbr.rel (0) target = $region41
    $region40: #{tpu_custom_call.1} parent=1 // pred_region
      %72 = dma.done [#allocation8], 1024
    $region41: #{tpu_custom_call.1} parent=1 // pred_fallthru
      _
    // Predicated region
    $region42: #{tpu_custom_call.1} parent=1 // pred_check
      _
    $region43: #{tpu_custom_call.1} parent=1 // pred_check_branch
      %74 = sbr.rel (0) target = $region45
    $region44: #{tpu_custom_call.1} parent=1 // pred_region
      %76 = dma.done [#allocation8], 2048
    $region45: #{tpu_custom_call.1} parent=1 // pred_fallthru
      _
    %v78 = vld [vmem:[#allocation4] sm:$0xf]
    %v79 = vld [vmem:[#allocation4 + $0x4] sm:$0xf]
    %v80 = vld [vmem:[#allocation4 + $0x8] sm:$0xf]
    %v81 = vld [vmem:[#allocation4 + $0xc] sm:$0xf]
    %v82 = vld [vmem:[#allocation4 + $0x10] sm:$0xf]
    %v83 = vld [vmem:[#allocation4 + $0x14] sm:$0xf]
    %v84 = vld [vmem:[#allocation4 + $0x18] sm:$0xf]
    %v85 = vld [vmem:[#allocation4 + $0x1c] sm:$0xf]
    %v86 = vld [vmem:[%s3] sm:$0xf]
    %v87 = vld [vmem:[%s3 + $0x4] sm:$0xf]
    %v88 = vld [vmem:[%s5] sm:$0x1]
    %v90 = vperm.slane %v88, 0
    %v100 = vunpack.c.l.b16 %v78
    %v101 = vunpack.c.l.b16 %v79
    %v102 = vunpack.c.l.b16 %v80
    %v103 = vunpack.c.l.b16 %v81
    %v104 = vunpack.c.l.b16 %v82
    %v105 = vunpack.c.l.b16 %v83
    %v106 = vunpack.c.l.b16 %v84
    %v107 = vunpack.c.l.b16 %v85
    %v108 = vpack.c.b16 %v101, %v100
    %v109 = vpack.c.b16 %v103, %v102
    %v110 = vpack.c.b16 %v105, %v104
    %v111 = vpack.c.b16 %v107, %v106
    %v114 = vunpack.c.l.b16 %v86
    %v115 = vunpack.c.l.b16 %v87
    %v116 = vpack.c.b16 %v115, %v114
    %vm118 = vcmask 130048
    %v120 = vsel %vm118, %v108, 0
    %v123 = vsel %vm118, %v109, 0
    %v126 = vsel %vm118, %v110, 0
    %v129 = vsel %vm118, %v111, 0
    %131 = vmatpush.bf16.msra.mxu0 0
    %132 = vmatpush.bf16.msra.mxu0 0
    %133 = vmatpush.bf16.msra.mxu0 0
    %134 = vmatpush.bf16.msra.mxu0 0
    %135 = vmatpush.bf16.msra.mxu0 0
    %136 = vmatpush.bf16.msra.mxu0 0
    %137 = vmatpush.bf16.msra.mxu0 0
    %138 = vmatpush.bf16.msra.mxu0 %v116
    %139 = vmatmul.bf16.gmra.mxu0 %v120
    %v140 = vpop.f32.mrf.mxu0
    %v141 = vadd.f32 %v90, %v140
    %v142 = vpop.f32.mrf.mxu0
    %v143 = vadd.f32 %v90, %v142
    %144 = vmatmul.bf16.gmra.mxu0 %v123
    %v145 = vpop.f32.mrf.mxu0
    %v146 = vadd.f32 %v90, %v145
    %v147 = vpop.f32.mrf.mxu0
    %v148 = vadd.f32 %v90, %v147
    %149 = vmatmul.bf16.gmra.mxu0 %v126
    %v150 = vpop.f32.mrf.mxu0
    %v151 = vadd.f32 %v90, %v150
    %v152 = vpop.f32.mrf.mxu0
    %v153 = vadd.f32 %v90, %v152
    %154 = vmatmul.bf16.gmra.mxu0 %v129
    %v155 = vpop.f32.mrf.mxu0
    %v156 = vadd.f32 %v90, %v155
    %v157 = vpop.f32.mrf.mxu0
    %v158 = vadd.f32 %v90, %v157
    %159 = vdwg.mxu0
    %160 = vst [vmem:[#allocation2] sm:$0xff] %v141
    %161 = vst [vmem:[#allocation2 + $0x8] sm:$0xff] %v143
    %162 = vst [vmem:[#allocation2 + $0x10] sm:$0xff] %v146
    %163 = vst [vmem:[#allocation2 + $0x18] sm:$0xff] %v148
    %164 = vst [vmem:[#allocation2 + $0x20] sm:$0xff] %v151
    %165 = vst [vmem:[#allocation2 + $0x28] sm:$0xff] %v153
    %166 = vst [vmem:[#allocation2 + $0x30] sm:$0xff] %v156
    %167 = vst [vmem:[#allocation2 + $0x38] sm:$0xff] %v158
    %v168 = vld [vmem:[%s1] sm:$0xff]
    %v169 = vld [vmem:[#allocation7] sm:$0xf]
    %v170 = vld [vmem:[#allocation7 + $0x4] sm:$0xf]
    %v171 = vld [vmem:[#allocation7 + $0x8] sm:$0xf]
    %v172 = vld [vmem:[#allocation7 + $0xc] sm:$0xf]
    %v173 = vld [vmem:[#allocation7 + $0x10] sm:$0xf]
    %v174 = vld [vmem:[#allocation7 + $0x14] sm:$0xf]
    %v175 = vld [vmem:[#allocation7 + $0x18] sm:$0xf]
    %v176 = vld [vmem:[#allocation7 + $0x1c] sm:$0xf]
    %v177 = vld [vmem:[#allocation7 + $0x20] sm:$0xf]
    %v178 = vld [vmem:[#allocation7 + $0x24] sm:$0xf]
    %v179 = vld [vmem:[#allocation7 + $0x28] sm:$0xf]
    %v180 = vld [vmem:[#allocation7 + $0x2c] sm:$0xf]
    %v181 = vld [vmem:[#allocation7 + $0x30] sm:$0xf]
    %v182 = vld [vmem:[#allocation7 + $0x34] sm:$0xf]
    %v183 = vld [vmem:[#allocation7 + $0x38] sm:$0xf]
    %v184 = vld [vmem:[#allocation7 + $0x3c] sm:$0xf]
    %v185 = vld [vmem:[#allocation9] sm:$0xf]
    %v186 = vld [vmem:[#allocation9 + $0x4] sm:$0xf]
    %v187 = vld [vmem:[#allocation9 + $0x8] sm:$0xf]
    %v188 = vld [vmem:[#allocation9 + $0xc] sm:$0xf]
    %v189 = vld [vmem:[#allocation9 + $0x10] sm:$0xf]
    %v190 = vld [vmem:[#allocation9 + $0x14] sm:$0xf]
    %v191 = vld [vmem:[#allocation9 + $0x18] sm:$0xf]
    %v192 = vld [vmem:[#allocation9 + $0x1c] sm:$0xf]
    %v193 = vld [vmem:[#allocation9 + $0x20] sm:$0xf]
    %v194 = vld [vmem:[#allocation9 + $0x24] sm:$0xf]
    %v195 = vld [vmem:[#allocation9 + $0x28] sm:$0xf]
    %v196 = vld [vmem:[#allocation9 + $0x2c] sm:$0xf]
    %v197 = vld [vmem:[#allocation9 + $0x30] sm:$0xf]
    %v198 = vld [vmem:[#allocation9 + $0x34] sm:$0xf]
    %v199 = vld [vmem:[#allocation9 + $0x38] sm:$0xf]
    %v200 = vld [vmem:[#allocation9 + $0x3c] sm:$0xf]
    %v201 = vld [vmem:[#allocation9 + $0x40] sm:$0xf]
    %v202 = vld [vmem:[#allocation9 + $0x44] sm:$0xf]
    %v203 = vld [vmem:[#allocation9 + $0x48] sm:$0xf]
    %v204 = vld [vmem:[#allocation9 + $0x4c] sm:$0xf]
    %v205 = vld [vmem:[#allocation9 + $0x50] sm:$0xf]
    %v206 = vld [vmem:[#allocation9 + $0x54] sm:$0xf]
    %v207 = vld [vmem:[#allocation9 + $0x58] sm:$0xf]
    %v208 = vld [vmem:[#allocation9 + $0x5c] sm:$0xf]
    %v209 = vld [vmem:[#allocation9 + $0x60] sm:$0xf]
    %v210 = vld [vmem:[#allocation9 + $0x64] sm:$0xf]
    %v211 = vld [vmem:[#allocation9 + $0x68] sm:$0xf]
    %v212 = vld [vmem:[#allocation9 + $0x6c] sm:$0xf]
    %v213 = vld [vmem:[#allocation9 + $0x70] sm:$0xf]
    %v214 = vld [vmem:[#allocation9 + $0x74] sm:$0xf]
    %v215 = vld [vmem:[#allocation9 + $0x78] sm:$0xf]
    %v216 = vld [vmem:[#allocation9 + $0x7c] sm:$0xf]
    %v217 = vld [vmem:[%s7] sm:$0x1]
    %v219 = vperm.slane %v217, 0
    %v221 = vld [vmem:[%s2] sm:$0x1]
    %v223 = vperm.slane %v221, 0
    %s225 = scalar_lea.vmem %s2, 1
    %v226 = vld [vmem:[%s225] sm:$0x1]
    %v228 = vperm.slane %v226, 0
    %v230 = vpack.c.bf16 %v228, %v228
    %231 = vst [vmem:[#allocation3 + $0x4] sm:$0xf] %v230
    %vm232 = vcmp.gt.s32.totalorder %v168, 0
    %v233 = vld [vmem:[#allocation2] sm:$0xff]
    %v234 = vpack.c.bf16 %v223, %v223
    %v251 = vunpack.c.l.b16 %v169
    %v252 = vunpack.c.l.b16 %v170
    %v253 = vunpack.c.l.b16 %v171
    %v254 = vunpack.c.l.b16 %v172
    %v255 = vunpack.c.l.b16 %v173
    %v256 = vunpack.c.l.b16 %v174
    %v257 = vunpack.c.l.b16 %v175
    %v258 = vunpack.c.l.b16 %v176
    %v259 = vunpack.c.l.b16 %v177
    %v260 = vunpack.c.l.b16 %v178
    %v261 = vunpack.c.l.b16 %v179
    %v262 = vunpack.c.l.b16 %v180
    %v263 = vunpack.c.l.b16 %v181
    %v264 = vunpack.c.l.b16 %v182
    %v265 = vunpack.c.l.b16 %v183
    %v266 = vunpack.c.l.b16 %v184
    %v267 = vpack.c.b16 %v252, %v251
    %v268 = vpack.c.b16 %v254, %v253
    %v269 = vpack.c.b16 %v256, %v255
    %v270 = vpack.c.b16 %v258, %v257
    %v271 = vpack.c.b16 %v260, %v259
    %v272 = vpack.c.b16 %v262, %v261
    %v273 = vpack.c.b16 %v264, %v263
    %v274 = vpack.c.b16 %v266, %v265
    %283 = vmatpush.bf16.msra.mxu0 %v274
    %284 = vmatpush.bf16.msra.mxu0 %v273
    %285 = vmatpush.bf16.msra.mxu0 %v272
    %286 = vmatpush.bf16.msra.mxu0 %v271
    %287 = vmatpush.bf16.msra.mxu0 %v270
    %288 = vmatpush.bf16.msra.mxu0 %v269
    %289 = vmatpush.bf16.msra.mxu0 %v268
    %290 = vmatpush.bf16.msra.mxu0 %v267
    %291 = vmatmul.bf16.gmra.mxu0 %v234
    %v292 = vpop.f32.mrf.mxu0
    %v293 = vadd.f32 0.0, %v292
    %v294 = vpop.f32.mrf.mxu0
    %295 = vdwg.mxu0
    %v296 = vadd.f32 %v233, %v293
    %v297 = vtanh.pop %v296
    %v298 = vsel %vm232, 1, 0
    %299 = vset.pattern.permute.xlu0 0
    %300 = vperm.xlu0 %299, %v298
    %v301 = vpop.permute.xlu0 %300
    %vm302 = vcmp.eq.s32.totalorder %v301, 1
    %v303 = vsel %vm302, %v297, %v223
    %v304 = vpack.c.bf16 %v303, %v303
    %305 = vst [vmem:[#allocation3] sm:$0xf] %v304
    %v306 = vld [vmem:[#allocation3] sm:$0xff]
    %v308 = vunpack.c.l.b16 %v306
    %v309 = vunpack.c.h.b16 %v306
    %v310 = vpack.c.b16 %v308, %v308
    %v311 = vpack.c.b16 %v309, %v309
    %v346 = vunpack.c.l.b16 %v185
    %v347 = vunpack.c.l.b16 %v186
    %v348 = vunpack.c.l.b16 %v187
    %v349 = vunpack.c.l.b16 %v188
    %v350 = vunpack.c.l.b16 %v189
    %v351 = vunpack.c.l.b16 %v190
    %v352 = vunpack.c.l.b16 %v191
    %v353 = vunpack.c.l.b16 %v192
    %v354 = vunpack.c.l.b16 %v193
    %v355 = vunpack.c.l.b16 %v194
    %v356 = vunpack.c.l.b16 %v195
    %v357 = vunpack.c.l.b16 %v196
    %v358 = vunpack.c.l.b16 %v197
    %v359 = vunpack.c.l.b16 %v198
    %v360 = vunpack.c.l.b16 %v199
    %v361 = vunpack.c.l.b16 %v200
    %v362 = vunpack.c.l.b16 %v201
    %v363 = vunpack.c.l.b16 %v202
    %v364 = vunpack.c.l.b16 %v203
    %v365 = vunpack.c.l.b16 %v204
    %v366 = vunpack.c.l.b16 %v205
    %v367 = vunpack.c.l.b16 %v206
    %v368 = vunpack.c.l.b16 %v207
    %v369 = vunpack.c.l.b16 %v208
    %v370 = vunpack.c.l.b16 %v209
    %v371 = vunpack.c.l.b16 %v210
    %v372 = vunpack.c.l.b16 %v211
    %v373 = vunpack.c.l.b16 %v212
    %v374 = vunpack.c.l.b16 %v213
    %v375 = vunpack.c.l.b16 %v214
    %v376 = vunpack.c.l.b16 %v215
    %v377 = vunpack.c.l.b16 %v216
    %v378 = vpack.c.b16 %v347, %v346
    %v379 = vpack.c.b16 %v349, %v348
    %v380 = vpack.c.b16 %v351, %v350
    %v381 = vpack.c.b16 %v353, %v352
    %v382 = vpack.c.b16 %v355, %v354
    %v383 = vpack.c.b16 %v357, %v356
    %v384 = vpack.c.b16 %v359, %v358
    %v385 = vpack.c.b16 %v361, %v360
    %v386 = vpack.c.b16 %v363, %v362
    %v387 = vpack.c.b16 %v365, %v364
    %v388 = vpack.c.b16 %v367, %v366
    %v389 = vpack.c.b16 %v369, %v368
    %v390 = vpack.c.b16 %v371, %v370
    %v391 = vpack.c.b16 %v373, %v372
    %v392 = vpack.c.b16 %v375, %v374
    %v393 = vpack.c.b16 %v377, %v376
    %410 = vmatpush.bf16.msra.mxu0 %v385
    %411 = vmatpush.bf16.msra.mxu0 %v384
    %412 = vmatpush.bf16.msra.mxu0 %v383
    %413 = vmatpush.bf16.msra.mxu0 %v382
    %414 = vmatpush.bf16.msra.mxu0 %v381
    %415 = vmatpush.bf16.msra.mxu0 %v380
    %416 = vmatpush.bf16.msra.mxu0 %v379
    %417 = vmatpush.bf16.msra.mxu0 %v378
    %418 = vmatmul.bf16.gmra.mxu0 %v310
    %v419 = vpop.f32.mrf.mxu0
    %v420 = vadd.f32 %v219, %v419
    %v421 = vpop.f32.mrf.mxu0
    %422 = vdwg.mxu0
    %423 = vmatpush.bf16.msra.mxu0 %v393
    %424 = vmatpush.bf16.msra.mxu0 %v392
    %425 = vmatpush.bf16.msra.mxu0 %v391
    %426 = vmatpush.bf16.msra.mxu0 %v390
    %427 = vmatpush.bf16.msra.mxu0 %v389
    %428 = vmatpush.bf16.msra.mxu0 %v388
    %429 = vmatpush.bf16.msra.mxu0 %v387
    %430 = vmatpush.bf16.msra.mxu0 %v386
    %431 = vmatmul.bf16.gmra.mxu0 %v311
    %v432 = vpop.f32.mrf.mxu0
    %v433 = vadd.f32 %v420, %v432
    %v434 = vpop.f32.mrf.mxu0
    %435 = vdwg.mxu0
    %v436 = vtanh.pop %v433
    %v437 = vsel %vm302, %v436, %v228
    %v438 = vpack.c.bf16 %v437, %v437
    %439 = vst [vmem:[#allocation3 + $0x4] sm:$0xf] %v438
    %vm440 = vcmp.gt.s32.totalorder %v168, 1
    %v441 = vld [vmem:[#allocation2 + $0x8] sm:$0xff]
    %442 = vmatpush.bf16.msra.mxu0 %v274
    %443 = vmatpush.bf16.msra.mxu0 %v273
    %444 = vmatpush.bf16.msra.mxu0 %v272
    %445 = vmatpush.bf16.msra.mxu0 %v271
    %446 = vmatpush.bf16.msra.mxu0 %v270
    %447 = vmatpush.bf16.msra.mxu0 %v269
    %448 = vmatpush.bf16.msra.mxu0 %v268
    %449 = vmatpush.bf16.msra.mxu0 %v267
    %450 = vmatmul.bf16.gmra.mxu0 %v304
    %v451 = vpop.f32.mrf.mxu0
    %v452 = vadd.f32 0.0, %v451
    %v453 = vpop.f32.mrf.mxu0
    %454 = vdwg.mxu0
    %v455 = vadd.f32 %v441, %v452
    %v456 = vtanh.pop %v455
    %v457 = vsel %vm440, 1, 0
    %458 = vset.pattern.permute.xlu0 0
    %459 = vperm.xlu0 %458, %v457
    %v460 = vpop.permute.xlu0 %459
    %vm461 = vcmp.eq.s32.totalorder %v460, 1
    %v462 = vsel %vm461, %v456, %v303
    %v463 = vpack.c.bf16 %v462, %v462
    %464 = vst [vmem:[#allocation3] sm:$0xf] %v463
    %v465 = vld [vmem:[#allocation3] sm:$0xff]
    %v467 = vunpack.c.l.b16 %v465
    %v468 = vunpack.c.h.b16 %v465
    %v469 = vpack.c.b16 %v467, %v467
    %v470 = vpack.c.b16 %v468, %v468
    %473 = vmatpush.bf16.msra.mxu0 %v385
    %474 = vmatpush.bf16.msra.mxu0 %v384
    %475 = vmatpush.bf16.msra.mxu0 %v383
    %476 = vmatpush.bf16.msra.mxu0 %v382
    %477 = vmatpush.bf16.msra.mxu0 %v381
    %478 = vmatpush.bf16.msra.mxu0 %v380
    %479 = vmatpush.bf16.msra.mxu0 %v379
    %480 = vmatpush.bf16.msra.mxu0 %v378
    %481 = vmatmul.bf16.gmra.mxu0 %v469
    %v482 = vpop.f32.mrf.mxu0
    %v483 = vadd.f32 %v219, %v482
    %v484 = vpop.f32.mrf.mxu0
    %485 = vdwg.mxu0
    %486 = vmatpush.bf16.msra.mxu0 %v393
    %487 = vmatpush.bf16.msra.mxu0 %v392
    %488 = vmatpush.bf16.msra.mxu0 %v391
    %489 = vmatpush.bf16.msra.mxu0 %v390
    %490 = vmatpush.bf16.msra.mxu0 %v389
    %491 = vmatpush.bf16.msra.mxu0 %v388
    %492 = vmatpush.bf16.msra.mxu0 %v387
    %493 = vmatpush.bf16.msra.mxu0 %v386
    %494 = vmatmul.bf16.gmra.mxu0 %v470
    %v495 = vpop.f32.mrf.mxu0
    %v496 = vadd.f32 %v483, %v495
    %v497 = vpop.f32.mrf.mxu0
    %498 = vdwg.mxu0
    %v499 = vtanh.pop %v496
    %v500 = vsel %vm461, %v499, %v437
    %v501 = vpack.c.bf16 %v500, %v500
    %502 = vst [vmem:[#allocation3 + $0x4] sm:$0xf] %v501
    %vm503 = vcmp.gt.s32.totalorder %v168, 2
    %v504 = vld [vmem:[#allocation2 + $0x10] sm:$0xff]
    %505 = vmatpush.bf16.msra.mxu0 %v274
    %506 = vmatpush.bf16.msra.mxu0 %v273
    %507 = vmatpush.bf16.msra.mxu0 %v272
    %508 = vmatpush.bf16.msra.mxu0 %v271
    %509 = vmatpush.bf16.msra.mxu0 %v270
    %510 = vmatpush.bf16.msra.mxu0 %v269
    %511 = vmatpush.bf16.msra.mxu0 %v268
    %512 = vmatpush.bf16.msra.mxu0 %v267
    %513 = vmatmul.bf16.gmra.mxu0 %v463
    %v514 = vpop.f32.mrf.mxu0
    %v515 = vadd.f32 0.0, %v514
    %v516 = vpop.f32.mrf.mxu0
    %517 = vdwg.mxu0
    %v518 = vadd.f32 %v504, %v515
    %v519 = vtanh.pop %v518
    %v520 = vsel %vm503, 1, 0
    %521 = vset.pattern.permute.xlu0 0
    %522 = vperm.xlu0 %521, %v520
    %v523 = vpop.permute.xlu0 %522
    %vm524 = vcmp.eq.s32.totalorder %v523, 1
    %v525 = vsel %vm524, %v519, %v462
    %v526 = vpack.c.bf16 %v525, %v525
    %527 = vst [vmem:[#allocation3] sm:$0xf] %v526
    %v528 = vld [vmem:[#allocation3] sm:$0xff]
    %v530 = vunpack.c.l.b16 %v528
    %v531 = vunpack.c.h.b16 %v528
    %v532 = vpack.c.b16 %v530, %v530
    %v533 = vpack.c.b16 %v531, %v531
    %536 = vmatpush.bf16.msra.mxu0 %v385
    %537 = vmatpush.bf16.msra.mxu0 %v384
    %538 = vmatpush.bf16.msra.mxu0 %v383
    %539 = vmatpush.bf16.msra.mxu0 %v382
    %540 = vmatpush.bf16.msra.mxu0 %v381
    %541 = vmatpush.bf16.msra.mxu0 %v380
    %542 = vmatpush.bf16.msra.mxu0 %v379
    %543 = vmatpush.bf16.msra.mxu0 %v378
    %544 = vmatmul.bf16.gmra.mxu0 %v532
    %v545 = vpop.f32.mrf.mxu0
    %v546 = vadd.f32 %v219, %v545
    %v547 = vpop.f32.mrf.mxu0
    %548 = vdwg.mxu0
    %549 = vmatpush.bf16.msra.mxu0 %v393
    %550 = vmatpush.bf16.msra.mxu0 %v392
    %551 = vmatpush.bf16.msra.mxu0 %v391
    %552 = vmatpush.bf16.msra.mxu0 %v390
    %553 = vmatpush.bf16.msra.mxu0 %v389
    %554 = vmatpush.bf16.msra.mxu0 %v388
    %555 = vmatpush.bf16.msra.mxu0 %v387
    %556 = vmatpush.bf16.msra.mxu0 %v386
    %557 = vmatmul.bf16.gmra.mxu0 %v533
    %v558 = vpop.f32.mrf.mxu0
    %v559 = vadd.f32 %v546, %v558
    %v560 = vpop.f32.mrf.mxu0
    %561 = vdwg.mxu0
    %v562 = vtanh.pop %v559
    %v563 = vsel %vm524, %v562, %v500
    %v564 = vpack.c.bf16 %v563, %v563
    %565 = vst [vmem:[#allocation3 + $0x4] sm:$0xf] %v564
    %vm566 = vcmp.gt.s32.totalorder %v168, 3
    %v567 = vld [vmem:[#allocation2 + $0x18] sm:$0xff]
    %568 = vmatpush.bf16.msra.mxu0 %v274
    %569 = vmatpush.bf16.msra.mxu0 %v273
    %570 = vmatpush.bf16.msra.mxu0 %v272
    %571 = vmatpush.bf16.msra.mxu0 %v271
    %572 = vmatpush.bf16.msra.mxu0 %v270
    %573 = vmatpush.bf16.msra.mxu0 %v269
    %574 = vmatpush.bf16.msra.mxu0 %v268
    %575 = vmatpush.bf16.msra.mxu0 %v267
    %576 = vmatmul.bf16.gmra.mxu0 %v526
    %v577 = vpop.f32.mrf.mxu0
    %v578 = vadd.f32 0.0, %v577
    %v579 = vpop.f32.mrf.mxu0
    %580 = vdwg.mxu0
    %v581 = vadd.f32 %v567, %v578
    %v582 = vtanh.pop %v581
    %v583 = vsel %vm566, 1, 0
    %584 = vset.pattern.permute.xlu0 0
    %585 = vperm.xlu0 %584, %v583
    %v586 = vpop.permute.xlu0 %585
    %vm587 = vcmp.eq.s32.totalorder %v586, 1
    %v588 = vsel %vm587, %v582, %v525
    %v589 = vpack.c.bf16 %v588, %v588
    %590 = vst [vmem:[#allocation3] sm:$0xf] %v589
    %v591 = vld [vmem:[#allocation3] sm:$0xff]
    %v593 = vunpack.c.l.b16 %v591
    %v594 = vunpack.c.h.b16 %v591
    %v595 = vpack.c.b16 %v593, %v593
    %v596 = vpack.c.b16 %v594, %v594
    %599 = vmatpush.bf16.msra.mxu0 %v385
    %600 = vmatpush.bf16.msra.mxu0 %v384
    %601 = vmatpush.bf16.msra.mxu0 %v383
    %602 = vmatpush.bf16.msra.mxu0 %v382
    %603 = vmatpush.bf16.msra.mxu0 %v381
    %604 = vmatpush.bf16.msra.mxu0 %v380
    %605 = vmatpush.bf16.msra.mxu0 %v379
    %606 = vmatpush.bf16.msra.mxu0 %v378
    %607 = vmatmul.bf16.gmra.mxu0 %v595
    %v608 = vpop.f32.mrf.mxu0
    %v609 = vadd.f32 %v219, %v608
    %v610 = vpop.f32.mrf.mxu0
    %611 = vdwg.mxu0
    %612 = vmatpush.bf16.msra.mxu0 %v393
    %613 = vmatpush.bf16.msra.mxu0 %v392
    %614 = vmatpush.bf16.msra.mxu0 %v391
    %615 = vmatpush.bf16.msra.mxu0 %v390
    %616 = vmatpush.bf16.msra.mxu0 %v389
    %617 = vmatpush.bf16.msra.mxu0 %v388
    %618 = vmatpush.bf16.msra.mxu0 %v387
    %619 = vmatpush.bf16.msra.mxu0 %v386
    %620 = vmatmul.bf16.gmra.mxu0 %v596
    %v621 = vpop.f32.mrf.mxu0
    %v622 = vadd.f32 %v609, %v621
    %v623 = vpop.f32.mrf.mxu0
    %624 = vdwg.mxu0
    %v625 = vtanh.pop %v622
    %v626 = vsel %vm587, %v625, %v563
    %v627 = vpack.c.bf16 %v626, %v626
    %628 = vst [vmem:[#allocation3 + $0x4] sm:$0xf] %v627
    %vm629 = vcmp.gt.s32.totalorder %v168, 4
    %v630 = vld [vmem:[#allocation2 + $0x20] sm:$0xff]
    %631 = vmatpush.bf16.msra.mxu0 %v274
    %632 = vmatpush.bf16.msra.mxu0 %v273
    %633 = vmatpush.bf16.msra.mxu0 %v272
    %634 = vmatpush.bf16.msra.mxu0 %v271
    %635 = vmatpush.bf16.msra.mxu0 %v270
    %636 = vmatpush.bf16.msra.mxu0 %v269
    %637 = vmatpush.bf16.msra.mxu0 %v268
    %638 = vmatpush.bf16.msra.mxu0 %v267
    %639 = vmatmul.bf16.gmra.mxu0 %v589
    %v640 = vpop.f32.mrf.mxu0
    %v641 = vadd.f32 0.0, %v640
    %v642 = vpop.f32.mrf.mxu0
    %643 = vdwg.mxu0
    %v644 = vadd.f32 %v630, %v641
    %v645 = vtanh.pop %v644
    %v646 = vsel %vm629, 1, 0
    %647 = vset.pattern.permute.xlu0 0
    %648 = vperm.xlu0 %647, %v646
    %v649 = vpop.permute.xlu0 %648
    %vm650 = vcmp.eq.s32.totalorder %v649, 1
    %v651 = vsel %vm650, %v645, %v588
    %v652 = vpack.c.bf16 %v651, %v651
    %653 = vst [vmem:[#allocation3] sm:$0xf] %v652
    %v654 = vld [vmem:[#allocation3] sm:$0xff]
    %v656 = vunpack.c.l.b16 %v654
    %v657 = vunpack.c.h.b16 %v654
    %v658 = vpack.c.b16 %v656, %v656
    %v659 = vpack.c.b16 %v657, %v657
    %662 = vmatpush.bf16.msra.mxu0 %v385
    %663 = vmatpush.bf16.msra.mxu0 %v384
    %664 = vmatpush.bf16.msra.mxu0 %v383
    %665 = vmatpush.bf16.msra.mxu0 %v382
    %666 = vmatpush.bf16.msra.mxu0 %v381
    %667 = vmatpush.bf16.msra.mxu0 %v380
    %668 = vmatpush.bf16.msra.mxu0 %v379
    %669 = vmatpush.bf16.msra.mxu0 %v378
    %670 = vmatmul.bf16.gmra.mxu0 %v658
    %v671 = vpop.f32.mrf.mxu0
    %v672 = vadd.f32 %v219, %v671
    %v673 = vpop.f32.mrf.mxu0
    %674 = vdwg.mxu0
    %675 = vmatpush.bf16.msra.mxu0 %v393
    %676 = vmatpush.bf16.msra.mxu0 %v392
    %677 = vmatpush.bf16.msra.mxu0 %v391
    %678 = vmatpush.bf16.msra.mxu0 %v390
    %679 = vmatpush.bf16.msra.mxu0 %v389
    %680 = vmatpush.bf16.msra.mxu0 %v388
    %681 = vmatpush.bf16.msra.mxu0 %v387
    %682 = vmatpush.bf16.msra.mxu0 %v386
    %683 = vmatmul.bf16.gmra.mxu0 %v659
    %v684 = vpop.f32.mrf.mxu0
    %v685 = vadd.f32 %v672, %v684
    %v686 = vpop.f32.mrf.mxu0
    %687 = vdwg.mxu0
    %v688 = vtanh.pop %v685
    %v689 = vsel %vm650, %v688, %v626
    %v690 = vpack.c.bf16 %v689, %v689
    %691 = vst [vmem:[#allocation3 + $0x4] sm:$0xf] %v690
    %vm692 = vcmp.gt.s32.totalorder %v168, 5
    %v693 = vld [vmem:[#allocation2 + $0x28] sm:$0xff]
    %694 = vmatpush.bf16.msra.mxu0 %v274
    %695 = vmatpush.bf16.msra.mxu0 %v273
    %696 = vmatpush.bf16.msra.mxu0 %v272
    %697 = vmatpush.bf16.msra.mxu0 %v271
    %698 = vmatpush.bf16.msra.mxu0 %v270
    %699 = vmatpush.bf16.msra.mxu0 %v269
    %700 = vmatpush.bf16.msra.mxu0 %v268
    %701 = vmatpush.bf16.msra.mxu0 %v267
    %702 = vmatmul.bf16.gmra.mxu0 %v652
    %v703 = vpop.f32.mrf.mxu0
    %v704 = vadd.f32 0.0, %v703
    %v705 = vpop.f32.mrf.mxu0
    %706 = vdwg.mxu0
    %v707 = vadd.f32 %v693, %v704
    %v708 = vtanh.pop %v707
    %v709 = vsel %vm692, 1, 0
    %710 = vset.pattern.permute.xlu0 0
    %711 = vperm.xlu0 %710, %v709
    %v712 = vpop.permute.xlu0 %711
    %vm713 = vcmp.eq.s32.totalorder %v712, 1
    %v714 = vsel %vm713, %v708, %v651
    %v715 = vpack.c.bf16 %v714, %v714
    %716 = vst [vmem:[#allocation3] sm:$0xf] %v715
    %v717 = vld [vmem:[#allocation3] sm:$0xff]
    %v719 = vunpack.c.l.b16 %v717
    %v720 = vunpack.c.h.b16 %v717
    %v721 = vpack.c.b16 %v719, %v719
    %v722 = vpack.c.b16 %v720, %v720
    %725 = vmatpush.bf16.msra.mxu0 %v385
    %726 = vmatpush.bf16.msra.mxu0 %v384
    %727 = vmatpush.bf16.msra.mxu0 %v383
    %728 = vmatpush.bf16.msra.mxu0 %v382
    %729 = vmatpush.bf16.msra.mxu0 %v381
    %730 = vmatpush.bf16.msra.mxu0 %v380
    %731 = vmatpush.bf16.msra.mxu0 %v379
    %732 = vmatpush.bf16.msra.mxu0 %v378
    %733 = vmatmul.bf16.gmra.mxu0 %v721
    %v734 = vpop.f32.mrf.mxu0
    %v735 = vadd.f32 %v219, %v734
    %v736 = vpop.f32.mrf.mxu0
    %737 = vdwg.mxu0
    %738 = vmatpush.bf16.msra.mxu0 %v393
    %739 = vmatpush.bf16.msra.mxu0 %v392
    %740 = vmatpush.bf16.msra.mxu0 %v391
    %741 = vmatpush.bf16.msra.mxu0 %v390
    %742 = vmatpush.bf16.msra.mxu0 %v389
    %743 = vmatpush.bf16.msra.mxu0 %v388
    %744 = vmatpush.bf16.msra.mxu0 %v387
    %745 = vmatpush.bf16.msra.mxu0 %v386
    %746 = vmatmul.bf16.gmra.mxu0 %v722
    %v747 = vpop.f32.mrf.mxu0
    %v748 = vadd.f32 %v735, %v747
    %v749 = vpop.f32.mrf.mxu0
    %750 = vdwg.mxu0
    %v751 = vtanh.pop %v748
    %v752 = vsel %vm713, %v751, %v689
    %v753 = vpack.c.bf16 %v752, %v752
    %754 = vst [vmem:[#allocation3 + $0x4] sm:$0xf] %v753
    %vm755 = vcmp.gt.s32.totalorder %v168, 6
    %v756 = vld [vmem:[#allocation2 + $0x30] sm:$0xff]
    %757 = vmatpush.bf16.msra.mxu0 %v274
    %758 = vmatpush.bf16.msra.mxu0 %v273
    %759 = vmatpush.bf16.msra.mxu0 %v272
    %760 = vmatpush.bf16.msra.mxu0 %v271
    %761 = vmatpush.bf16.msra.mxu0 %v270
    %762 = vmatpush.bf16.msra.mxu0 %v269
    %763 = vmatpush.bf16.msra.mxu0 %v268
    %764 = vmatpush.bf16.msra.mxu0 %v267
    %765 = vmatmul.bf16.gmra.mxu0 %v715
    %v766 = vpop.f32.mrf.mxu0
    %v767 = vadd.f32 0.0, %v766
    %v768 = vpop.f32.mrf.mxu0
    %769 = vdwg.mxu0
    %v770 = vadd.f32 %v756, %v767
    %v771 = vtanh.pop %v770
    %v772 = vsel %vm755, 1, 0
    %773 = vset.pattern.permute.xlu0 0
    %774 = vperm.xlu0 %773, %v772
    %v775 = vpop.permute.xlu0 %774
    %vm776 = vcmp.eq.s32.totalorder %v775, 1
    %v777 = vsel %vm776, %v771, %v714
    %v778 = vpack.c.bf16 %v777, %v777
    %779 = vst [vmem:[#allocation3] sm:$0xf] %v778
    %v780 = vld [vmem:[#allocation3] sm:$0xff]
    %v782 = vunpack.c.l.b16 %v780
    %v783 = vunpack.c.h.b16 %v780
    %v784 = vpack.c.b16 %v782, %v782
    %v785 = vpack.c.b16 %v783, %v783
    %788 = vmatpush.bf16.msra.mxu0 %v385
    %789 = vmatpush.bf16.msra.mxu0 %v384
    %790 = vmatpush.bf16.msra.mxu0 %v383
    %791 = vmatpush.bf16.msra.mxu0 %v382
    %792 = vmatpush.bf16.msra.mxu0 %v381
    %793 = vmatpush.bf16.msra.mxu0 %v380
    %794 = vmatpush.bf16.msra.mxu0 %v379
    %795 = vmatpush.bf16.msra.mxu0 %v378
    %796 = vmatmul.bf16.gmra.mxu0 %v784
    %v797 = vpop.f32.mrf.mxu0
    %v798 = vadd.f32 %v219, %v797
    %v799 = vpop.f32.mrf.mxu0
    %800 = vdwg.mxu0
    %801 = vmatpush.bf16.msra.mxu0 %v393
    %802 = vmatpush.bf16.msra.mxu0 %v392
    %803 = vmatpush.bf16.msra.mxu0 %v391
    %804 = vmatpush.bf16.msra.mxu0 %v390
    %805 = vmatpush.bf16.msra.mxu0 %v389
    %806 = vmatpush.bf16.msra.mxu0 %v388
    %807 = vmatpush.bf16.msra.mxu0 %v387
    %808 = vmatpush.bf16.msra.mxu0 %v386
    %809 = vmatmul.bf16.gmra.mxu0 %v785
    %v810 = vpop.f32.mrf.mxu0
    %v811 = vadd.f32 %v798, %v810
    %v812 = vpop.f32.mrf.mxu0
    %813 = vdwg.mxu0
    %v814 = vtanh.pop %v811
    %v815 = vsel %vm776, %v814, %v752
    %v816 = vpack.c.bf16 %v815, %v815
    %817 = vst [vmem:[#allocation3 + $0x4] sm:$0xf] %v816
    %vm818 = vcmp.gt.s32.totalorder %v168, 7
    %v819 = vld [vmem:[#allocation2 + $0x38] sm:$0xff]
    %820 = vmatpush.bf16.msra.mxu0 %v274
    %821 = vmatpush.bf16.msra.mxu0 %v273
    %822 = vmatpush.bf16.msra.mxu0 %v272
    %823 = vmatpush.bf16.msra.mxu0 %v271
    %824 = vmatpush.bf16.msra.mxu0 %v270
    %825 = vmatpush.bf16.msra.mxu0 %v269
    %826 = vmatpush.bf16.msra.mxu0 %v268
    %827 = vmatpush.bf16.msra.mxu0 %v267
    %828 = vmatmul.bf16.gmra.mxu0 %v778
    %v829 = vpop.f32.mrf.mxu0
    %v830 = vadd.f32 0.0, %v829
    %v831 = vpop.f32.mrf.mxu0
    %832 = vdwg.mxu0
    %v833 = vadd.f32 %v819, %v830
    %v834 = vtanh.pop %v833
    %v835 = vsel %vm818, 1, 0
    %836 = vset.pattern.permute.xlu0 0
    %837 = vperm.xlu0 %836, %v835
    %v838 = vpop.permute.xlu0 %837
    %vm839 = vcmp.eq.s32.totalorder %v838, 1
    %v840 = vsel %vm839, %v834, %v777
    %v841 = vpack.c.bf16 %v840, %v840
    %842 = vst [vmem:[#allocation3] sm:$0xf] %v841
    %v843 = vld [vmem:[#allocation3] sm:$0xff]
    %v845 = vunpack.c.l.b16 %v843
    %v846 = vunpack.c.h.b16 %v843
    %v847 = vpack.c.b16 %v845, %v845
    %v848 = vpack.c.b16 %v846, %v846
    %851 = vmatpush.bf16.msra.mxu0 %v385
    %852 = vmatpush.bf16.msra.mxu0 %v384
    %853 = vmatpush.bf16.msra.mxu0 %v383
    %854 = vmatpush.bf16.msra.mxu0 %v382
    %855 = vmatpush.bf16.msra.mxu0 %v381
    %856 = vmatpush.bf16.msra.mxu0 %v380
    %857 = vmatpush.bf16.msra.mxu0 %v379
    %858 = vmatpush.bf16.msra.mxu0 %v378
    %859 = vmatmul.bf16.gmra.mxu0 %v847
    %v860 = vpop.f32.mrf.mxu0
    %v861 = vadd.f32 %v219, %v860
    %v862 = vpop.f32.mrf.mxu0
    %863 = vdwg.mxu0
    %864 = vmatpush.bf16.msra.mxu0 %v393
    %865 = vmatpush.bf16.msra.mxu0 %v392
    %866 = vmatpush.bf16.msra.mxu0 %v391
    %867 = vmatpush.bf16.msra.mxu0 %v390
    %868 = vmatpush.bf16.msra.mxu0 %v389
    %869 = vmatpush.bf16.msra.mxu0 %v388
    %870 = vmatpush.bf16.msra.mxu0 %v387
    %871 = vmatpush.bf16.msra.mxu0 %v386
    %872 = vmatmul.bf16.gmra.mxu0 %v848
    %v873 = vpop.f32.mrf.mxu0
    %v874 = vadd.f32 %v861, %v873
    %v875 = vpop.f32.mrf.mxu0
    %876 = vdwg.mxu0
    %v877 = vtanh.pop %v874
    %v878 = vsel %vm839, %v877, %v815
    %v879 = vpack.c.bf16 %v878, %v878
    %880 = vst [vmem:[#allocation3 + $0x4] sm:$0xf] %v879
    %881 = vst [vmem:[#allocation10] sm:$0xff] %v840
    %882 = vst [vmem:[#allocation10 + $0x8] sm:$0xff] %v878
    // Predicated region
    $region46: #{tpu_custom_call.1} parent=1 // pred_check
      _
    $region47: #{tpu_custom_call.1} parent=1 // pred_check_branch
      %884 = sbr.rel (0) target = $region49
    $region48: #{tpu_custom_call.1} parent=1 // pred_region
      %886 = vsyncadd [#allocation6], 0
      %s888 = sshll.u32 [#allocation10], 4
      %s889 = int_to_ptr.vmem [resolvable:$true] %s888
      %s890 = sshll.u32 %s8, 4
      %s891 = int_to_ptr.hbm [resolvable:$true] %s890
      %893 = dma.vmem_to_hbm [thread:$0]  %s889, 256, %s891, [#allocation6]
    $region49: #{tpu_custom_call.1} parent=1 // pred_fallthru
      _
    // Predicated region
    $region50: #{tpu_custom_call.1} parent=1 // pred_check
      _
    $region51: #{tpu_custom_call.1} parent=1 // pred_check_branch
      %895 = sbr.rel (0) target = $region53
    $region52: #{tpu_custom_call.1} parent=1 // pred_region
      %897 = dma.done [#allocation6], 256
    $region53: #{tpu_custom_call.1} parent=1 // pred_fallthru
      _
    %898 = vsyncpa [#allocation5], 1
    %899 = vsyncpa [#allocation8], 1
    %900 = vsyncpa [#allocation6], 1

</llo_original>
